<compile_context>
chip_gen: v7x
topology: tpu7x:2x2x1
jax: 0.10.0
libtpu: 0.0.40
codegen_flags: <defaults>
</compile_context>

<pallas_src>
import jax
import jax.numpy as jnp
from jax import lax
from jax.experimental import pallas as pl
from jax.experimental.pallas import tpu as pltpu  # noqa: F401  (memory spaces if needed)

FEAT_DIM = 768        # feat_dim / BERT CLS hidden size
TARGET_SIZE = 16      # number of intent classes
LOGIT_PAD = 128       # lane-dense padded logit width (>= TARGET_SIZE)
BATCH = 8             # batch size (multiple of 8 for sublane alignment)
DROP_RATE = 0.1       # args.drop_rate


def supcon_fused_kernel(hidden_ref, mask_ref, head_w_ref, head_b_ref,
                        cls_w_ref, cls_b_ref, emb_ref, logit_ref):
    """Fused contrastive + classify branches (reads `hidden` once).

    hidden_ref : [B, F]         f32   CLS hidden state
    mask_ref   : [B, F]         f32   pre-scaled dropout keep mask (0 or 1/(1-p))
    head_w_ref : [F, F]         bf16  head weight, pre-transposed to (in, out)
    head_b_ref : [1, F]         f32
    cls_w_ref  : [F, LOGIT_PAD] bf16  classify weight, pre-transposed + lane-padded
    cls_b_ref  : [1, LOGIT_PAD] f32
    emb_ref    : [B, F]         f32   head(head(normalize(dropout(hidden))))
    logit_ref  : [B, LOGIT_PAD] f32   classify(hidden); lanes >= T are bias-only pad
    """
    h = hidden_ref[...]

    # ---------------- contrastive branch ----------------
    # nn.Dropout(drop_rate): mask precomputed in wrapper (already 1/(1-p) scaled).
    h1 = h * mask_ref[...]
    # F.normalize(p=2, dim=1): x / max(||x||, 1e-12) == x * rsqrt(max(sumsq, 1e-24)).
    sumsq = jnp.sum(h1 * h1, axis=1, keepdims=True)
    h1n = h1 * lax.rsqrt(jnp.maximum(sumsq, 1e-24))

    w = head_w_ref[...]
    b = head_b_ref[...]
    # feature1 = head(normalize(hidden1))      (feature2 is unused in the reference)
    feat1 = jnp.dot(h1n.astype(jnp.bfloat16), w,
                    preferred_element_type=jnp.float32) + b
    # embedding = head(cat([feature1.unsqueeze(1)]*2, dim=1)) -- head acts on the
    # last dim, so both pair rows are identical: compute once, duplicate in wrapper.
    emb_ref[...] = jnp.dot(feat1.astype(jnp.bfloat16), w,
                           preferred_element_type=jnp.float32) + b

    # ---------------- classify branch (no dropout) ----------------
    logit_ref[...] = jnp.dot(h.astype(jnp.bfloat16), cls_w_ref[...],
                             preferred_element_type=jnp.float32) + cls_b_ref[...]


@jax.jit
def _fused_call(hidden, mask, head_w_t, head_b2, cls_w_pad, cls_b_pad):
    B, F = hidden.shape
    cost = pl.CostEstimate(
        flops=2 * B * F * F * 2 + 2 * B * F * LOGIT_PAD,
        transcendentals=B,
        bytes_accessed=(2 * 4 * B * F                 # hidden + mask
                        + 2 * F * F + 4 * F           # bf16 head weight + bias
                        + 2 * F * LOGIT_PAD + 4 * LOGIT_PAD
                        + 4 * B * F + 4 * B * LOGIT_PAD),  # outputs
    )
    emb, logit_pad = pl.pallas_call(
        supcon_fused_kernel,
        out_shape=(jax.ShapeDtypeStruct((B, F), jnp.float32),
                   jax.ShapeDtypeStruct((B, LOGIT_PAD), jnp.float32)),
        in_specs=[
            pl.BlockSpec((B, F), lambda: (0, 0)),            # hidden
            pl.BlockSpec((B, F), lambda: (0, 0)),            # dropout mask
            pl.BlockSpec((F, F), lambda: (0, 0)),            # head weight (in,out) bf16
            pl.BlockSpec((1, F), lambda: (0, 0)),            # head bias
            pl.BlockSpec((F, LOGIT_PAD), lambda: (0, 0)),    # classify weight padded bf16
            pl.BlockSpec((1, LOGIT_PAD), lambda: (0, 0)),    # classify bias padded
        ],
        out_specs=(pl.BlockSpec((B, F), lambda: (0, 0)),
                   pl.BlockSpec((B, LOGIT_PAD), lambda: (0, 0))),
        cost_estimate=cost,
    )(hidden, mask, head_w_t, head_b2, cls_w_pad, cls_b_pad)
    return emb, logit_pad


def make_dropout_mask(rng, shape):
    # nn.Dropout: keep w.p. (1-p), survivors scaled by 1/(1-p).
    keep = jax.random.uniform(rng, shape, jnp.float32) >= DROP_RATE
    return keep.astype(jnp.float32) * (1.0 / (1.0 - DROP_RATE))


def supcon_forward_fused(hidden, params, dropout_rng):
    """One kernel launch -> (embedding (B,2,F), logits (B,T))."""
    head_w_t, head_b2, cls_w_pad, cls_b_pad = params
    B, F = hidden.shape
    mask = make_dropout_mask(dropout_rng, (B, F))
    emb, logit_pad = _fused_call(hidden, mask, head_w_t, head_b2, cls_w_pad, cls_b_pad)
    # torch.cat([feature1.unsqueeze(1), feature1.unsqueeze(1)], dim=1) -> (B, 2, F)
    embedding = jnp.broadcast_to(emb[:, None, :], (B, 2, F))
    logits = logit_pad[:, :TARGET_SIZE]
    return embedding, logits


def supcon_forward(hidden, params, contrastive=False, dropout_rng=None):
    """API parity with SupConModel.forward(contrastive=...)."""
    if dropout_rng is None:
        dropout_rng = jax.random.PRNGKey(0)
    embedding, logits = supcon_forward_fused(hidden, params, dropout_rng)
    return embedding if contrastive else logits


def xavier_uniform(key, shape):
    fan_out, fan_in = shape
    bound = (6.0 / (fan_in + fan_out)) ** 0.5
    return jax.random.uniform(key, shape, jnp.float32, -bound, bound)


def linear_bias(key, fan_in, out_dim):
    bound = 1.0 / (fan_in ** 0.5)
    return jax.random.uniform(key, (out_dim,), jnp.float32, -bound, bound)


def init_params(key):
    k_hw, k_hb, k_cw, k_cb = jax.random.split(key, 4)
    # self.head = nn.Linear(feat_dim, feat_dim), xavier_uniform_ weight
    head_w = xavier_uniform(k_hw, (FEAT_DIM, FEAT_DIM))    # (out, in) like PyTorch
    head_b = linear_bias(k_hb, FEAT_DIM, FEAT_DIM)
    # self.classify = nn.Linear(feat_dim, target_size), xavier_uniform_ weight
    cls_w = xavier_uniform(k_cw, (TARGET_SIZE, FEAT_DIM))  # (out, in)
    cls_b = linear_bias(k_cb, FEAT_DIM, TARGET_SIZE)

    # Pre-transpose / pad / cast ONCE (never per forward call).
    head_w_t = head_w.T.astype(jnp.bfloat16)               # (F, F)  in x out
    head_b2 = head_b.reshape(1, FEAT_DIM)
    cls_w_pad = jnp.zeros((FEAT_DIM, LOGIT_PAD), jnp.float32)
    cls_w_pad = cls_w_pad.at[:, :TARGET_SIZE].set(cls_w.T).astype(jnp.bfloat16)
    cls_b_pad = jnp.zeros((1, LOGIT_PAD), jnp.float32)
    cls_b_pad = cls_b_pad.at[:, :TARGET_SIZE].set(cls_b)
    return head_w_t, head_b2, cls_w_pad, cls_b_pad


if __name__ == "__main__":
    key = jax.random.PRNGKey(0)
    k_h, k_params, k_drop = jax.random.split(key, 3)

    # Synthetic CLS hidden state standing in for encoder(**inputs).last_hidden_state[:, 0, :]
    hidden = jax.random.normal(k_h, (BATCH, FEAT_DIM), jnp.float32)
    params = init_params(k_params)

    # Single fused launch produces both branches' outputs.
    embedding, logits = supcon_forward_fused(hidden, params, k_drop)

    jax.block_until_ready(embedding)
    jax.block_until_ready(logits)

    assert embedding.shape == (BATCH, 2, FEAT_DIM)
    assert logits.shape == (BATCH, TARGET_SIZE)
    assert bool(jnp.all(jnp.isfinite(embedding))) and bool(jnp.all(jnp.isfinite(logits)))
    print("KERNEL_OK")
</pallas_src>

<mosaic_0001>
module attributes {stable_mosaic.version = 11 : i64} {
  func.func @supcon_fused_kernel(%arg0: memref<8x768xf32, #tpu.memory_space<vmem>>, %arg1: memref<8x768xf32, #tpu.memory_space<vmem>>, %arg2: memref<768x768xbf16, #tpu.memory_space<vmem>>, %arg3: memref<1x768xf32, #tpu.memory_space<vmem>>, %arg4: memref<768x128xbf16, #tpu.memory_space<vmem>>, %arg5: memref<1x128xf32, #tpu.memory_space<vmem>>, %arg6: memref<8x768xf32, #tpu.memory_space<vmem>>, %arg7: memref<8x128xf32, #tpu.memory_space<vmem>>) attributes {dimension_semantics = [], scalar_prefetch = 0 : i64, scratch_operands = 0 : i64, tpu.core_type = #tpu.core_type<tc>} {
    %c0 = arith.constant 0 : index
    %c0_0 = arith.constant 0 : index
    %0 = vector.load %arg0[%c0, %c0_0] : memref<8x768xf32, #tpu.memory_space<vmem>>, vector<8x768xf32>
    %c0_1 = arith.constant 0 : index
    %c0_2 = arith.constant 0 : index
    %1 = vector.load %arg1[%c0_1, %c0_2] : memref<8x768xf32, #tpu.memory_space<vmem>>, vector<8x768xf32>
    %2 = arith.mulf %0, %1 : vector<8x768xf32>
    %3 = arith.mulf %2, %2 : vector<8x768xf32>
    %cst = arith.constant dense<0.000000e+00> : vector<8xf32>
    %4 = vector.multi_reduction <add>, %3, %cst [1] : vector<8x768xf32> to vector<8xf32>
    %5 = vector.shape_cast %4 : vector<8xf32> to vector<8x1xf32>
    %cst_3 = arith.constant 1.000000e-24 : f32
    %6 = vector.broadcast %cst_3 : f32 to vector<8x1xf32>
    %7 = arith.maximumf %5, %6 : vector<8x1xf32>
    %8 = math.rsqrt %7 : vector<8x1xf32>
    %9 = vector.broadcast %8 : vector<8x1xf32> to vector<8x768xf32>
    %10 = arith.mulf %2, %9 : vector<8x768xf32>
    %c0_4 = arith.constant 0 : index
    %c0_5 = arith.constant 0 : index
    %11 = vector.load %arg2[%c0_4, %c0_5] : memref<768x768xbf16, #tpu.memory_space<vmem>>, vector<768x768xbf16>
    %c0_6 = arith.constant 0 : index
    %c0_7 = arith.constant 0 : index
    %12 = vector.load %arg3[%c0_6, %c0_7] : memref<1x768xf32, #tpu.memory_space<vmem>>, vector<1x768xf32>
    %13 = arith.truncf %10 : vector<8x768xf32> to vector<8x768xbf16>
    %cst_8 = arith.constant dense<0.000000e+00> : vector<8x768xf32>
    %14 = tpu.matmul %13, %11, %cst_8 {dimension_numbers = #tpu.dot_dimension_numbers<[1], [0], [0], [1], [0, 0, 1, 1], [], []>} : vector<8x768xbf16>, vector<768x768xbf16>, vector<8x768xf32> -> vector<8x768xf32>
    %15 = vector.broadcast %12 : vector<1x768xf32> to vector<8x768xf32>
    %16 = arith.addf %14, %15 : vector<8x768xf32>
    %17 = arith.truncf %16 : vector<8x768xf32> to vector<8x768xbf16>
    %cst_9 = arith.constant dense<0.000000e+00> : vector<8x768xf32>
    %18 = tpu.matmul %17, %11, %cst_9 {dimension_numbers = #tpu.dot_dimension_numbers<[1], [0], [0], [1], [0, 0, 1, 1], [], []>} : vector<8x768xbf16>, vector<768x768xbf16>, vector<8x768xf32> -> vector<8x768xf32>
    %19 = vector.broadcast %12 : vector<1x768xf32> to vector<8x768xf32>
    %20 = arith.addf %18, %19 : vector<8x768xf32>
    %c0_10 = arith.constant 0 : index
    %c0_11 = arith.constant 0 : index
    %21 = vector.load %arg6[%c0_10, %c0_11] : memref<8x768xf32, #tpu.memory_space<vmem>>, vector<8x768xf32>
    tpu.vector_store %arg6[%c0_10, %c0_11], %20 {strides = array<i32>} : memref<8x768xf32, #tpu.memory_space<vmem>>, vector<8x768xf32>,
    %22 = arith.truncf %0 : vector<8x768xf32> to vector<8x768xbf16>
    %c0_12 = arith.constant 0 : index
    %c0_13 = arith.constant 0 : index
    %23 = vector.load %arg4[%c0_12, %c0_13] : memref<768x128xbf16, #tpu.memory_space<vmem>>, vector<768x128xbf16>
    %cst_14 = arith.constant dense<0.000000e+00> : vector<8x128xf32>
    %24 = tpu.matmul %22, %23, %cst_14 {dimension_numbers = #tpu.dot_dimension_numbers<[1], [0], [0], [1], [0, 0, 1, 1], [], []>} : vector<8x768xbf16>, vector<768x128xbf16>, vector<8x128xf32> -> vector<8x128xf32>
    %c0_15 = arith.constant 0 : index
    %c0_16 = arith.constant 0 : index
    %25 = vector.load %arg5[%c0_15, %c0_16] : memref<1x128xf32, #tpu.memory_space<vmem>>, vector<1x128xf32>
    %26 = vector.broadcast %25 : vector<1x128xf32> to vector<8x128xf32>
    %27 = arith.addf %24, %26 : vector<8x128xf32>
    %c0_17 = arith.constant 0 : index
    %c0_18 = arith.constant 0 : index
    %28 = vector.load %arg7[%c0_17, %c0_18] : memref<8x128xf32, #tpu.memory_space<vmem>>, vector<8x128xf32>
    tpu.vector_store %arg7[%c0_17, %c0_18], %27 {strides = array<i32>} : memref<8x128xf32, #tpu.memory_space<vmem>>, vector<8x128xf32>,
    return
  }
}

</mosaic_0001>

<llo_original>
// kernel: _fused_call.1
$region0: #{_fused_call.1}
  #allocation0 [shape = 'u32[]', space=smem, size = 0x4, offset = 0x4, fixed_abs, tag = 'smem constant byte address 0x4 - core index']
  #allocation1 [shape = 'u32[144,128]{1,0:T(1,128)}', space=vmem, size = 0x12000, scoped, tag = 'internal scratch']
  %s0 = inlined_call_operand.hbm [shape: f32[8,768], index: 0, kind: input, shape index: {}]
  %s1 = inlined_call_operand.hbm [shape: f32[8,768], index: 1, kind: input, shape index: {}]
  %s2 = inlined_call_operand.hbm [shape: bf16[768,768], index: 2, kind: input, shape index: {}]
  %s3 = inlined_call_operand.hbm [shape: f32[1,768], index: 3, kind: input, shape index: {}]
  %s4 = inlined_call_operand.hbm [shape: bf16[768,128], index: 4, kind: input, shape index: {}]
  %s5 = inlined_call_operand.hbm [shape: f32[1,128], index: 5, kind: input, shape index: {}]
  %s6 = inlined_call_operand.hbm [shape: f32[8,768], index: 6, kind: output, shape index: {0}]
  %s7 = inlined_call_operand.hbm [shape: f32[8,128], index: 7, kind: output, shape index: {1}]
  %8 = xla_tuple %s6, %s7
  %s9 = sld [smem:[#allocation0]]
  $region66: #{_fused_call.1} parent=0
    _
  %s11 = ssub.s32 1, %s9
  %s12 = scalar_select 0, %s11, %s9
  $region1: #{_fused_call.1} parent=0
    #allocation2 [shape = 'u8[24576]{0}', space=vmem, size = 0x6000, scoped, tag = 'input window, operand 0, single buffered']
    #allocation3 [shape = 's32[1]{0}', space=sflag, size = 0x4, scoped, tag = 'scoped memory for _fused_call.1']
    #allocation4 [shape = 's32[1]{0}', space=sflag, size = 0x4, scoped, tag = 'scoped memory for _fused_call.1']
    #allocation5 [shape = 'u8[24576]{0}', space=vmem, size = 0x6000, scoped, tag = 'input window, operand 1, single buffered']
    #allocation6 [shape = 's32[1]{0}', space=sflag, size = 0x4, scoped, tag = 'scoped memory for _fused_call.1']
    #allocation7 [shape = 'u8[1179648]{0}', space=vmem, size = 0x120000, scoped, tag = 'input window, operand 2, single buffered']
    #allocation8 [shape = 'u8[3072]{0}', space=vmem, size = 0xc00, scoped, tag = 'input window, operand 3, single buffered']
    #allocation9 [shape = 's32[1]{0}', space=sflag, size = 0x4, scoped, tag = 'scoped memory for _fused_call.1']
    #allocation10 [shape = 'u8[196608]{0}', space=vmem, size = 0x30000, scoped, tag = 'input window, operand 4, single buffered']
    #allocation11 [shape = 'u8[512]{0}', space=vmem, size = 0x400, scoped, tag = 'input window, operand 5, single buffered']
    #allocation12 [shape = 's32[1]{0}', space=sflag, size = 0x4, scoped, tag = 'scoped memory for _fused_call.1']
    #allocation13 [shape = 'u8[24576]{0}', space=vmem, size = 0x6000, scoped, tag = 'output window, operand 0, single buffered']
    #allocation14 [shape = 'u8[4096]{0}', space=vmem, size = 0x1000, scoped, tag = 'output window, operand 1, single buffered']
    #allocation15 [shape = 's32[1]{0}', space=sflag, size = 0x4, scoped, tag = 'scoped memory for _fused_call.1']
    %13 = vsyncpa [#allocation3], 0
    %14 = vsyncpa [#allocation6], 0
    %15 = vsyncpa [#allocation9], 0
    %16 = vsyncpa [#allocation12], 0
    %17 = vsyncpa [#allocation4], 0
    %18 = vsyncpa [#allocation15], 0
    // Predicated region
    $region2: #{_fused_call.1} parent=1 // pred_check
      _
    $region3: #{_fused_call.1} parent=1 // pred_check_branch
      %20 = sbr.rel (0) target = $region5
    $region4: #{_fused_call.1} parent=1 // pred_region
      %s22 = ssub.s32 768, 768
      %23 = vsyncadd [#allocation3], %s22
      %s25 = sshll.u32 [#allocation2], 4
      %s26 = int_to_ptr.vmem [resolvable:$true] %s25
      %28 = dma.hbm_to_vmem [thread:$0]  %s0, 768, %s26, [#allocation3]
    $region5: #{_fused_call.1} parent=1 // pred_fallthru
      _
    // Predicated region
    $region6: #{_fused_call.1} parent=1 // pred_check
      _
    $region7: #{_fused_call.1} parent=1 // pred_check_branch
      %30 = sbr.rel (0) target = $region9
    $region8: #{_fused_call.1} parent=1 // pred_region
      %s32 = ssub.s32 768, 768
      %33 = vsyncadd [#allocation6], %s32
      %s35 = sshll.u32 [#allocation5], 4
      %s36 = int_to_ptr.vmem [resolvable:$true] %s35
      %38 = dma.hbm_to_vmem [thread:$0]  %s1, 768, %s36, [#allocation6]
    $region9: #{_fused_call.1} parent=1 // pred_fallthru
      _
    // Predicated region
    $region10: #{_fused_call.1} parent=1 // pred_check
      _
    $region11: #{_fused_call.1} parent=1 // pred_check_branch
      %40 = sbr.rel (0) target = $region13
    $region12: #{_fused_call.1} parent=1 // pred_region
      %s42 = ssub.s32 36864, 36864
      %43 = vsyncadd [#allocation6], %s42
      %s44 = sshll.u32 [#allocation7], 4
      %s45 = int_to_ptr.vmem [resolvable:$true] %s44
      %50 = dma.hbm_to_vmem [thread:$0]  %s2, 36864, %s45, [#allocation6], 384, 384, 24
    $region13: #{_fused_call.1} parent=1 // pred_fallthru
      _
    // Predicated region
    $region14: #{_fused_call.1} parent=1 // pred_check
      _
    $region15: #{_fused_call.1} parent=1 // pred_check_branch
      %52 = sbr.rel (0) target = $region17
    $region16: #{_fused_call.1} parent=1 // pred_region
      %s54 = ssub.s32 96, 96
      %55 = vsyncadd [#allocation9], %s54
      %s57 = sshll.u32 [#allocation8], 4
      %s58 = int_to_ptr.vmem [resolvable:$true] %s57
      %60 = dma.hbm_to_vmem [thread:$0]  %s3, 96, %s58, [#allocation9]
    $region17: #{_fused_call.1} parent=1 // pred_fallthru
      _
    // Predicated region
    $region18: #{_fused_call.1} parent=1 // pred_check
      _
    $region19: #{_fused_call.1} parent=1 // pred_check_branch
      %62 = sbr.rel (0) target = $region21
    $region20: #{_fused_call.1} parent=1 // pred_region
      %s64 = ssub.s32 6144, 6144
      %65 = vsyncadd [#allocation9], %s64
      %s66 = sshll.u32 [#allocation10], 4
      %s67 = int_to_ptr.vmem [resolvable:$true] %s66
      %72 = dma.hbm_to_vmem [thread:$0]  %s4, 6144, %s67, [#allocation9], 64, 64, 4
    $region21: #{_fused_call.1} parent=1 // pred_fallthru
      _
    // Predicated region
    $region22: #{_fused_call.1} parent=1 // pred_check
      _
    $region23: #{_fused_call.1} parent=1 // pred_check_branch
      %74 = sbr.rel (0) target = $region25
    $region24: #{_fused_call.1} parent=1 // pred_region
      %s76 = ssub.s32 16, 16
      %77 = vsyncadd [#allocation12], %s76
      %s79 = sshll.u32 [#allocation11], 4
      %s80 = int_to_ptr.vmem [resolvable:$true] %s79
      %82 = dma.hbm_to_vmem [thread:$0]  %s5, 16, %s80, [#allocation12]
    $region25: #{_fused_call.1} parent=1 // pred_fallthru
      _
    // Predicated region
    $region26: #{_fused_call.1} parent=1 // pred_check
      _
    $region27: #{_fused_call.1} parent=1 // pred_check_branch
      %84 = sbr.rel (0) target = $region29
    $region28: #{_fused_call.1} parent=1 // pred_region
      %85 = dma.done [#allocation3], 768
    $region29: #{_fused_call.1} parent=1 // pred_fallthru
      _
    // Predicated region
    $region30: #{_fused_call.1} parent=1 // pred_check
      _
    $region31: #{_fused_call.1} parent=1 // pred_check_branch
      %87 = sbr.rel (0) target = $region33
    $region32: #{_fused_call.1} parent=1 // pred_region
      %88 = dma.done [#allocation6], 768
    $region33: #{_fused_call.1} parent=1 // pred_fallthru
      _
    // Predicated region
    $region34: #{_fused_call.1} parent=1 // pred_check
      _
    $region35: #{_fused_call.1} parent=1 // pred_check_branch
      %90 = sbr.rel (0) target = $region37
    $region36: #{_fused_call.1} parent=1 // pred_region
      %91 = dma.done [#allocation6], 36864
    $region37: #{_fused_call.1} parent=1 // pred_fallthru
      _
    // Predicated region
    $region38: #{_fused_call.1} parent=1 // pred_check
      _
    $region39: #{_fused_call.1} parent=1 // pred_check_branch
      %93 = sbr.rel (0) target = $region41
    $region40: #{_fused_call.1} parent=1 // pred_region
      %94 = dma.done [#allocation9], 96
    $region41: #{_fused_call.1} parent=1 // pred_fallthru
      _
    // Predicated region
    $region42: #{_fused_call.1} parent=1 // pred_check
      _
    $region43: #{_fused_call.1} parent=1 // pred_check_branch
      %96 = sbr.rel (0) target = $region45
    $region44: #{_fused_call.1} parent=1 // pred_region
      %97 = dma.done [#allocation9], 6144
    $region45: #{_fused_call.1} parent=1 // pred_fallthru
      _
    // Predicated region
    $region46: #{_fused_call.1} parent=1 // pred_check
      _
    $region47: #{_fused_call.1} parent=1 // pred_check_branch
      %99 = sbr.rel (0) target = $region49
    $region48: #{_fused_call.1} parent=1 // pred_region
      %100 = dma.done [#allocation12], 16
    $region49: #{_fused_call.1} parent=1 // pred_fallthru
      _
    %v102 = vld [vmem:[#allocation2] sm:$0xff]
    %v103 = vld [vmem:[#allocation2 + $0x8] sm:$0xff]
    %v104 = vld [vmem:[#allocation2 + $0x10] sm:$0xff]
    %v105 = vld [vmem:[#allocation2 + $0x18] sm:$0xff]
    %v106 = vld [vmem:[#allocation2 + $0x20] sm:$0xff]
    %v107 = vld [vmem:[#allocation2 + $0x28] sm:$0xff]
    %v108 = vld [vmem:[#allocation5] sm:$0xff]
    %v109 = vld [vmem:[#allocation5 + $0x8] sm:$0xff]
    %v110 = vld [vmem:[#allocation5 + $0x10] sm:$0xff]
    %v111 = vld [vmem:[#allocation5 + $0x18] sm:$0xff]
    %v112 = vld [vmem:[#allocation5 + $0x20] sm:$0xff]
    %v113 = vld [vmem:[#allocation5 + $0x28] sm:$0xff]
    %v114 = vmul.f32 %v102, %v108
    %v115 = vmul.f32 %v103, %v109
    %v116 = vmul.f32 %v104, %v110
    %v117 = vmul.f32 %v105, %v111
    %v118 = vmul.f32 %v106, %v112
    %v119 = vmul.f32 %v107, %v113
    %v120 = vmul.f32 %v114, %v114
    %v121 = vmul.f32 %v115, %v115
    %v122 = vmul.f32 %v116, %v116
    %v123 = vmul.f32 %v117, %v117
    %v124 = vmul.f32 %v118, %v118
    %v125 = vmul.f32 %v119, %v119
    %v126 = vadd.f32 %v120, %v121
    %v127 = vadd.f32 %v126, %v122
    %v128 = vadd.f32 %v127, %v123
    %v129 = vadd.f32 %v128, %v124
    %v130 = vadd.f32 %v129, %v125
    %131 = vadd.xlane.f32.xlu0 %v130
    %v132 = vpop.xlane.xlu0 %131
    %v133 = vmax.f32 %v132, 1e-24
    %v134 = vrsqrt.pop %v133
    %v135 = vmul.f32 %v114, %v134
    %v136 = vmul.f32 %v115, %v134
    %v137 = vmul.f32 %v116, %v134
    %v138 = vmul.f32 %v117, %v134
    %v139 = vmul.f32 %v118, %v134
    %v140 = vmul.f32 %v119, %v134
    %v141 = vld [vmem:[#allocation7] sm:$0xff]
    %v142 = vld [vmem:[#allocation7 + $0x8] sm:$0xff]
    %v143 = vld [vmem:[#allocation7 + $0x10] sm:$0xff]
    %v144 = vld [vmem:[#allocation7 + $0x18] sm:$0xff]
    %v145 = vld [vmem:[#allocation7 + $0x20] sm:$0xff]
    %v146 = vld [vmem:[#allocation7 + $0x28] sm:$0xff]
    %v147 = vld [vmem:[#allocation7 + $0x30] sm:$0xff]
    %v148 = vld [vmem:[#allocation7 + $0x38] sm:$0xff]
    %v149 = vld [vmem:[#allocation7 + $0x40] sm:$0xff]
    %v150 = vld [vmem:[#allocation7 + $0x48] sm:$0xff]
    %v151 = vld [vmem:[#allocation7 + $0x50] sm:$0xff]
    %v152 = vld [vmem:[#allocation7 + $0x58] sm:$0xff]
    %v153 = vld [vmem:[#allocation7 + $0x60] sm:$0xff]
    %v154 = vld [vmem:[#allocation7 + $0x68] sm:$0xff]
    %v155 = vld [vmem:[#allocation7 + $0x70] sm:$0xff]
    %v156 = vld [vmem:[#allocation7 + $0x78] sm:$0xff]
    %v157 = vld [vmem:[#allocation7 + $0x80] sm:$0xff]
    %v158 = vld [vmem:[#allocation7 + $0x88] sm:$0xff]
    %v159 = vld [vmem:[#allocation7 + $0x90] sm:$0xff]
    %v160 = vld [vmem:[#allocation7 + $0x98] sm:$0xff]
    %v161 = vld [vmem:[#allocation7 + $0xa0] sm:$0xff]
    %v162 = vld [vmem:[#allocation7 + $0xa8] sm:$0xff]
    %v163 = vld [vmem:[#allocation7 + $0xb0] sm:$0xff]
    %v164 = vld [vmem:[#allocation7 + $0xb8] sm:$0xff]
    %v165 = vld [vmem:[#allocation7 + $0xc0] sm:$0xff]
    %v166 = vld [vmem:[#allocation7 + $0xc8] sm:$0xff]
    %v167 = vld [vmem:[#allocation7 + $0xd0] sm:$0xff]
    %v168 = vld [vmem:[#allocation7 + $0xd8] sm:$0xff]
    %v169 = vld [vmem:[#allocation7 + $0xe0] sm:$0xff]
    %v170 = vld [vmem:[#allocation7 + $0xe8] sm:$0xff]
    %v171 = vld [vmem:[#allocation7 + $0xf0] sm:$0xff]
    %v172 = vld [vmem:[#allocation7 + $0xf8] sm:$0xff]
    %v173 = vld [vmem:[#allocation7 + $0x100] sm:$0xff]
    %v174 = vld [vmem:[#allocation7 + $0x108] sm:$0xff]
    %v175 = vld [vmem:[#allocation7 + $0x110] sm:$0xff]
    %v176 = vld [vmem:[#allocation7 + $0x118] sm:$0xff]
    %v177 = vld [vmem:[#allocation7 + $0x120] sm:$0xff]
    %v178 = vld [vmem:[#allocation7 + $0x128] sm:$0xff]
    %v179 = vld [vmem:[#allocation7 + $0x130] sm:$0xff]
    %v180 = vld [vmem:[#allocation7 + $0x138] sm:$0xff]
    %v181 = vld [vmem:[#allocation7 + $0x140] sm:$0xff]
    %v182 = vld [vmem:[#allocation7 + $0x148] sm:$0xff]
    %v183 = vld [vmem:[#allocation7 + $0x150] sm:$0xff]
    %v184 = vld [vmem:[#allocation7 + $0x158] sm:$0xff]
    %v185 = vld [vmem:[#allocation7 + $0x160] sm:$0xff]
    %v186 = vld [vmem:[#allocation7 + $0x168] sm:$0xff]
    %v187 = vld [vmem:[#allocation7 + $0x170] sm:$0xff]
    %v188 = vld [vmem:[#allocation7 + $0x178] sm:$0xff]
    %v189 = vld [vmem:[#allocation7 + $0x180] sm:$0xff]
    %v190 = vld [vmem:[#allocation7 + $0x188] sm:$0xff]
    %v191 = vld [vmem:[#allocation7 + $0x190] sm:$0xff]
    %v192 = vld [vmem:[#allocation7 + $0x198] sm:$0xff]
    %v193 = vld [vmem:[#allocation7 + $0x1a0] sm:$0xff]
    %v194 = vld [vmem:[#allocation7 + $0x1a8] sm:$0xff]
    %v195 = vld [vmem:[#allocation7 + $0x1b0] sm:$0xff]
    %v196 = vld [vmem:[#allocation7 + $0x1b8] sm:$0xff]
    %v197 = vld [vmem:[#allocation7 + $0x1c0] sm:$0xff]
    %v198 = vld [vmem:[#allocation7 + $0x1c8] sm:$0xff]
    %v199 = vld [vmem:[#allocation7 + $0x1d0] sm:$0xff]
    %v200 = vld [vmem:[#allocation7 + $0x1d8] sm:$0xff]
    %v201 = vld [vmem:[#allocation7 + $0x1e0] sm:$0xff]
    %v202 = vld [vmem:[#allocation7 + $0x1e8] sm:$0xff]
    %v203 = vld [vmem:[#allocation7 + $0x1f0] sm:$0xff]
    %v204 = vld [vmem:[#allocation7 + $0x1f8] sm:$0xff]
    %v205 = vld [vmem:[#allocation7 + $0x200] sm:$0xff]
    %v206 = vld [vmem:[#allocation7 + $0x208] sm:$0xff]
    %v207 = vld [vmem:[#allocation7 + $0x210] sm:$0xff]
    %v208 = vld [vmem:[#allocation7 + $0x218] sm:$0xff]
    %v209 = vld [vmem:[#allocation7 + $0x220] sm:$0xff]
    %v210 = vld [vmem:[#allocation7 + $0x228] sm:$0xff]
    %v211 = vld [vmem:[#allocation7 + $0x230] sm:$0xff]
    %v212 = vld [vmem:[#allocation7 + $0x238] sm:$0xff]
    %v213 = vld [vmem:[#allocation7 + $0x240] sm:$0xff]
    %v214 = vld [vmem:[#allocation7 + $0x248] sm:$0xff]
    %v215 = vld [vmem:[#allocation7 + $0x250] sm:$0xff]
    %v216 = vld [vmem:[#allocation7 + $0x258] sm:$0xff]
    %v217 = vld [vmem:[#allocation7 + $0x260] sm:$0xff]
    %v218 = vld [vmem:[#allocation7 + $0x268] sm:$0xff]
    %v219 = vld [vmem:[#allocation7 + $0x270] sm:$0xff]
    %v220 = vld [vmem:[#allocation7 + $0x278] sm:$0xff]
    %v221 = vld [vmem:[#allocation7 + $0x280] sm:$0xff]
    %v222 = vld [vmem:[#allocation7 + $0x288] sm:$0xff]
    %v223 = vld [vmem:[#allocation7 + $0x290] sm:$0xff]
    %v224 = vld [vmem:[#allocation7 + $0x298] sm:$0xff]
    %v225 = vld [vmem:[#allocation7 + $0x2a0] sm:$0xff]
    %v226 = vld [vmem:[#allocation7 + $0x2a8] sm:$0xff]
    %v227 = vld [vmem:[#allocation7 + $0x2b0] sm:$0xff]
    %v228 = vld [vmem:[#allocation7 + $0x2b8] sm:$0xff]
    %v229 = vld [vmem:[#allocation7 + $0x2c0] sm:$0xff]
    %v230 = vld [vmem:[#allocation7 + $0x2c8] sm:$0xff]
    %v231 = vld [vmem:[#allocation7 + $0x2d0] sm:$0xff]
    %v232 = vld [vmem:[#allocation7 + $0x2d8] sm:$0xff]
    %v233 = vld [vmem:[#allocation7 + $0x2e0] sm:$0xff]
    %v234 = vld [vmem:[#allocation7 + $0x2e8] sm:$0xff]
    %v235 = vld [vmem:[#allocation7 + $0x2f0] sm:$0xff]
    %v236 = vld [vmem:[#allocation7 + $0x2f8] sm:$0xff]
    %v237 = vld [vmem:[#allocation7 + $0x300] sm:$0xff]
    %v238 = vld [vmem:[#allocation7 + $0x308] sm:$0xff]
    %v239 = vld [vmem:[#allocation7 + $0x310] sm:$0xff]
    %v240 = vld [vmem:[#allocation7 + $0x318] sm:$0xff]
    %v241 = vld [vmem:[#allocation7 + $0x320] sm:$0xff]
    %v242 = vld [vmem:[#allocation7 + $0x328] sm:$0xff]
    %v243 = vld [vmem:[#allocation7 + $0x330] sm:$0xff]
    %v244 = vld [vmem:[#allocation7 + $0x338] sm:$0xff]
    %v245 = vld [vmem:[#allocation7 + $0x340] sm:$0xff]
    %v246 = vld [vmem:[#allocation7 + $0x348] sm:$0xff]
    %v247 = vld [vmem:[#allocation7 + $0x350] sm:$0xff]
    %v248 = vld [vmem:[#allocation7 + $0x358] sm:$0xff]
    %v249 = vld [vmem:[#allocation7 + $0x360] sm:$0xff]
    %v250 = vld [vmem:[#allocation7 + $0x368] sm:$0xff]
    %v251 = vld [vmem:[#allocation7 + $0x370] sm:$0xff]
    %v252 = vld [vmem:[#allocation7 + $0x378] sm:$0xff]
    %v253 = vld [vmem:[#allocation7 + $0x380] sm:$0xff]
    %v254 = vld [vmem:[#allocation7 + $0x388] sm:$0xff]
    %v255 = vld [vmem:[#allocation7 + $0x390] sm:$0xff]
    %v256 = vld [vmem:[#allocation7 + $0x398] sm:$0xff]
    %v257 = vld [vmem:[#allocation7 + $0x3a0] sm:$0xff]
    %v258 = vld [vmem:[#allocation7 + $0x3a8] sm:$0xff]
    %v259 = vld [vmem:[#allocation7 + $0x3b0] sm:$0xff]
    %v260 = vld [vmem:[#allocation7 + $0x3b8] sm:$0xff]
    %v261 = vld [vmem:[#allocation7 + $0x3c0] sm:$0xff]
    %v262 = vld [vmem:[#allocation7 + $0x3c8] sm:$0xff]
    %v263 = vld [vmem:[#allocation7 + $0x3d0] sm:$0xff]
    %v264 = vld [vmem:[#allocation7 + $0x3d8] sm:$0xff]
    %v265 = vld [vmem:[#allocation7 + $0x3e0] sm:$0xff]
    %v266 = vld [vmem:[#allocation7 + $0x3e8] sm:$0xff]
    %v267 = vld [vmem:[#allocation7 + $0x3f0] sm:$0xff]
    %v268 = vld [vmem:[#allocation7 + $0x3f8] sm:$0xff]
    %v269 = vld [vmem:[#allocation7 + $0x400] sm:$0xff]
    %v270 = vld [vmem:[#allocation7 + $0x408] sm:$0xff]
    %v271 = vld [vmem:[#allocation7 + $0x410] sm:$0xff]
    %v272 = vld [vmem:[#allocation7 + $0x418] sm:$0xff]
    %v273 = vld [vmem:[#allocation7 + $0x420] sm:$0xff]
    %v274 = vld [vmem:[#allocation7 + $0x428] sm:$0xff]
    %v275 = vld [vmem:[#allocation7 + $0x430] sm:$0xff]
    %v276 = vld [vmem:[#allocation7 + $0x438] sm:$0xff]
    %v277 = vld [vmem:[#allocation7 + $0x440] sm:$0xff]
    %v278 = vld [vmem:[#allocation7 + $0x448] sm:$0xff]
    %v279 = vld [vmem:[#allocation7 + $0x450] sm:$0xff]
    %v280 = vld [vmem:[#allocation7 + $0x458] sm:$0xff]
    %v281 = vld [vmem:[#allocation7 + $0x460] sm:$0xff]
    %v282 = vld [vmem:[#allocation7 + $0x468] sm:$0xff]
    %v283 = vld [vmem:[#allocation7 + $0x470] sm:$0xff]
    %v284 = vld [vmem:[#allocation7 + $0x478] sm:$0xff]
    %v285 = vld [vmem:[#allocation7 + $0x480] sm:$0xff]
    %v286 = vld [vmem:[#allocation7 + $0x488] sm:$0xff]
    %v287 = vld [vmem:[#allocation7 + $0x490] sm:$0xff]
    %v288 = vld [vmem:[#allocation7 + $0x498] sm:$0xff]
    %v289 = vld [vmem:[#allocation7 + $0x4a0] sm:$0xff]
    %v290 = vld [vmem:[#allocation7 + $0x4a8] sm:$0xff]
    %v291 = vld [vmem:[#allocation7 + $0x4b0] sm:$0xff]
    %v292 = vld [vmem:[#allocation7 + $0x4b8] sm:$0xff]
    %v293 = vld [vmem:[#allocation7 + $0x4c0] sm:$0xff]
    %v294 = vld [vmem:[#allocation7 + $0x4c8] sm:$0xff]
    %v295 = vld [vmem:[#allocation7 + $0x4d0] sm:$0xff]
    %v296 = vld [vmem:[#allocation7 + $0x4d8] sm:$0xff]
    %v297 = vld [vmem:[#allocation7 + $0x4e0] sm:$0xff]
    %v298 = vld [vmem:[#allocation7 + $0x4e8] sm:$0xff]
    %v299 = vld [vmem:[#allocation7 + $0x4f0] sm:$0xff]
    %v300 = vld [vmem:[#allocation7 + $0x4f8] sm:$0xff]
    %v301 = vld [vmem:[#allocation7 + $0x500] sm:$0xff]
    %v302 = vld [vmem:[#allocation7 + $0x508] sm:$0xff]
    %v303 = vld [vmem:[#allocation7 + $0x510] sm:$0xff]
    %v304 = vld [vmem:[#allocation7 + $0x518] sm:$0xff]
    %v305 = vld [vmem:[#allocation7 + $0x520] sm:$0xff]
    %v306 = vld [vmem:[#allocation7 + $0x528] sm:$0xff]
    %v307 = vld [vmem:[#allocation7 + $0x530] sm:$0xff]
    %v308 = vld [vmem:[#allocation7 + $0x538] sm:$0xff]
    %v309 = vld [vmem:[#allocation7 + $0x540] sm:$0xff]
    %v310 = vld [vmem:[#allocation7 + $0x548] sm:$0xff]
    %v311 = vld [vmem:[#allocation7 + $0x550] sm:$0xff]
    %v312 = vld [vmem:[#allocation7 + $0x558] sm:$0xff]
    %v313 = vld [vmem:[#allocation7 + $0x560] sm:$0xff]
    %v314 = vld [vmem:[#allocation7 + $0x568] sm:$0xff]
    %v315 = vld [vmem:[#allocation7 + $0x570] sm:$0xff]
    %v316 = vld [vmem:[#allocation7 + $0x578] sm:$0xff]
    %v317 = vld [vmem:[#allocation7 + $0x580] sm:$0xff]
    %v318 = vld [vmem:[#allocation7 + $0x588] sm:$0xff]
    %v319 = vld [vmem:[#allocation7 + $0x590] sm:$0xff]
    %v320 = vld [vmem:[#allocation7 + $0x598] sm:$0xff]
    %v321 = vld [vmem:[#allocation7 + $0x5a0] sm:$0xff]
    %v322 = vld [vmem:[#allocation7 + $0x5a8] sm:$0xff]
    %v323 = vld [vmem:[#allocation7 + $0x5b0] sm:$0xff]
    %v324 = vld [vmem:[#allocation7 + $0x5b8] sm:$0xff]
    %v325 = vld [vmem:[#allocation7 + $0x5c0] sm:$0xff]
    %v326 = vld [vmem:[#allocation7 + $0x5c8] sm:$0xff]
    %v327 = vld [vmem:[#allocation7 + $0x5d0] sm:$0xff]
    %v328 = vld [vmem:[#allocation7 + $0x5d8] sm:$0xff]
    %v329 = vld [vmem:[#allocation7 + $0x5e0] sm:$0xff]
    %v330 = vld [vmem:[#allocation7 + $0x5e8] sm:$0xff]
    %v331 = vld [vmem:[#allocation7 + $0x5f0] sm:$0xff]
    %v332 = vld [vmem:[#allocation7 + $0x5f8] sm:$0xff]
    %v333 = vld [vmem:[#allocation7 + $0x600] sm:$0xff]
    %v334 = vld [vmem:[#allocation7 + $0x608] sm:$0xff]
    %v335 = vld [vmem:[#allocation7 + $0x610] sm:$0xff]
    %v336 = vld [vmem:[#allocation7 + $0x618] sm:$0xff]
    %v337 = vld [vmem:[#allocation7 + $0x620] sm:$0xff]
    %v338 = vld [vmem:[#allocation7 + $0x628] sm:$0xff]
    %v339 = vld [vmem:[#allocation7 + $0x630] sm:$0xff]
    %v340 = vld [vmem:[#allocation7 + $0x638] sm:$0xff]
    %v341 = vld [vmem:[#allocation7 + $0x640] sm:$0xff]
    %v342 = vld [vmem:[#allocation7 + $0x648] sm:$0xff]
    %v343 = vld [vmem:[#allocation7 + $0x650] sm:$0xff]
    %v344 = vld [vmem:[#allocation7 + $0x658] sm:$0xff]
    %v345 = vld [vmem:[#allocation7 + $0x660] sm:$0xff]
    %v346 = vld [vmem:[#allocation7 + $0x668] sm:$0xff]
    %v347 = vld [vmem:[#allocation7 + $0x670] sm:$0xff]
    %v348 = vld [vmem:[#allocation7 + $0x678] sm:$0xff]
    %v349 = vld [vmem:[#allocation7 + $0x680] sm:$0xff]
    %v350 = vld [vmem:[#allocation7 + $0x688] sm:$0xff]
    %v351 = vld [vmem:[#allocation7 + $0x690] sm:$0xff]
    %v352 = vld [vmem:[#allocation7 + $0x698] sm:$0xff]
    %v353 = vld [vmem:[#allocation7 + $0x6a0] sm:$0xff]
    %v354 = vld [vmem:[#allocation7 + $0x6a8] sm:$0xff]
    %v355 = vld [vmem:[#allocation7 + $0x6b0] sm:$0xff]
    %v356 = vld [vmem:[#allocation7 + $0x6b8] sm:$0xff]
    %v357 = vld [vmem:[#allocation7 + $0x6c0] sm:$0xff]
    %v358 = vld [vmem:[#allocation7 + $0x6c8] sm:$0xff]
    %v359 = vld [vmem:[#allocation7 + $0x6d0] sm:$0xff]
    %v360 = vld [vmem:[#allocation7 + $0x6d8] sm:$0xff]
    %v361 = vld [vmem:[#allocation7 + $0x6e0] sm:$0xff]
    %v362 = vld [vmem:[#allocation7 + $0x6e8] sm:$0xff]
    %v363 = vld [vmem:[#allocation7 + $0x6f0] sm:$0xff]
    %v364 = vld [vmem:[#allocation7 + $0x6f8] sm:$0xff]
    %v365 = vld [vmem:[#allocation7 + $0x700] sm:$0xff]
    %v366 = vld [vmem:[#allocation7 + $0x708] sm:$0xff]
    %v367 = vld [vmem:[#allocation7 + $0x710] sm:$0xff]
    %v368 = vld [vmem:[#allocation7 + $0x718] sm:$0xff]
    %v369 = vld [vmem:[#allocation7 + $0x720] sm:$0xff]
    %v370 = vld [vmem:[#allocation7 + $0x728] sm:$0xff]
    %v371 = vld [vmem:[#allocation7 + $0x730] sm:$0xff]
    %v372 = vld [vmem:[#allocation7 + $0x738] sm:$0xff]
    %v373 = vld [vmem:[#allocation7 + $0x740] sm:$0xff]
    %v374 = vld [vmem:[#allocation7 + $0x748] sm:$0xff]
    %v375 = vld [vmem:[#allocation7 + $0x750] sm:$0xff]
    %v376 = vld [vmem:[#allocation7 + $0x758] sm:$0xff]
    %v377 = vld [vmem:[#allocation7 + $0x760] sm:$0xff]
    %v378 = vld [vmem:[#allocation7 + $0x768] sm:$0xff]
    %v379 = vld [vmem:[#allocation7 + $0x770] sm:$0xff]
    %v380 = vld [vmem:[#allocation7 + $0x778] sm:$0xff]
    %v381 = vld [vmem:[#allocation7 + $0x780] sm:$0xff]
    %v382 = vld [vmem:[#allocation7 + $0x788] sm:$0xff]
    %v383 = vld [vmem:[#allocation7 + $0x790] sm:$0xff]
    %v384 = vld [vmem:[#allocation7 + $0x798] sm:$0xff]
    %v385 = vld [vmem:[#allocation7 + $0x7a0] sm:$0xff]
    %v386 = vld [vmem:[#allocation7 + $0x7a8] sm:$0xff]
    %v387 = vld [vmem:[#allocation7 + $0x7b0] sm:$0xff]
    %v388 = vld [vmem:[#allocation7 + $0x7b8] sm:$0xff]
    %v389 = vld [vmem:[#allocation7 + $0x7c0] sm:$0xff]
    %v390 = vld [vmem:[#allocation7 + $0x7c8] sm:$0xff]
    %v391 = vld [vmem:[#allocation7 + $0x7d0] sm:$0xff]
    %v392 = vld [vmem:[#allocation7 + $0x7d8] sm:$0xff]
    %v393 = vld [vmem:[#allocation7 + $0x7e0] sm:$0xff]
    %v394 = vld [vmem:[#allocation7 + $0x7e8] sm:$0xff]
    %v395 = vld [vmem:[#allocation7 + $0x7f0] sm:$0xff]
    %v396 = vld [vmem:[#allocation7 + $0x7f8] sm:$0xff]
    %v397 = vld [vmem:[#allocation7 + $0x800] sm:$0xff]
    %v398 = vld [vmem:[#allocation7 + $0x808] sm:$0xff]
    %v399 = vld [vmem:[#allocation7 + $0x810] sm:$0xff]
    %v400 = vld [vmem:[#allocation7 + $0x818] sm:$0xff]
    %v401 = vld [vmem:[#allocation7 + $0x820] sm:$0xff]
    %v402 = vld [vmem:[#allocation7 + $0x828] sm:$0xff]
    %v403 = vld [vmem:[#allocation7 + $0x830] sm:$0xff]
    %v404 = vld [vmem:[#allocation7 + $0x838] sm:$0xff]
    %v405 = vld [vmem:[#allocation7 + $0x840] sm:$0xff]
    %v406 = vld [vmem:[#allocation7 + $0x848] sm:$0xff]
    %v407 = vld [vmem:[#allocation7 + $0x850] sm:$0xff]
    %v408 = vld [vmem:[#allocation7 + $0x858] sm:$0xff]
    %v409 = vld [vmem:[#allocation7 + $0x860] sm:$0xff]
    %v410 = vld [vmem:[#allocation7 + $0x868] sm:$0xff]
    %v411 = vld [vmem:[#allocation7 + $0x870] sm:$0xff]
    %v412 = vld [vmem:[#allocation7 + $0x878] sm:$0xff]
    %v413 = vld [vmem:[#allocation7 + $0x880] sm:$0xff]
    %v414 = vld [vmem:[#allocation7 + $0x888] sm:$0xff]
    %v415 = vld [vmem:[#allocation7 + $0x890] sm:$0xff]
    %v416 = vld [vmem:[#allocation7 + $0x898] sm:$0xff]
    %v417 = vld [vmem:[#allocation7 + $0x8a0] sm:$0xff]
    %v418 = vld [vmem:[#allocation7 + $0x8a8] sm:$0xff]
    %v419 = vld [vmem:[#allocation7 + $0x8b0] sm:$0xff]
    %v420 = vld [vmem:[#allocation7 + $0x8b8] sm:$0xff]
    %v421 = vld [vmem:[#allocation7 + $0x8c0] sm:$0xff]
    %v422 = vld [vmem:[#allocation7 + $0x8c8] sm:$0xff]
    %v423 = vld [vmem:[#allocation7 + $0x8d0] sm:$0xff]
    %v424 = vld [vmem:[#allocation7 + $0x8d8] sm:$0xff]
    %v425 = vld [vmem:[#allocation7 + $0x8e0] sm:$0xff]
    %v426 = vld [vmem:[#allocation7 + $0x8e8] sm:$0xff]
    %v427 = vld [vmem:[#allocation7 + $0x8f0] sm:$0xff]
    %v428 = vld [vmem:[#allocation7 + $0x8f8] sm:$0xff]
    %v429 = vld [vmem:[#allocation8] sm:$0x3f]
    %v430 = vpack.c.bf16 %v135, %v135
    %v431 = vpack.c.bf16 %v136, %v136
    %v432 = vpack.c.bf16 %v137, %v137
    %v433 = vpack.c.bf16 %v138, %v138
    %v434 = vpack.c.bf16 %v139, %v139
    %v435 = vpack.c.bf16 %v140, %v140
    %v437 = vlaneseq
    %v438 = vshrl.u32 %v437, 7
    %v439 = vsub.s32 0, %v438
    %v440 = vrot.slane %v429, %v439
    %v441 = vlaneseq
    %v442 = vshrl.u32 %v441, 7
    %v443 = vsub.s32 1, %v442
    %v444 = vrot.slane %v429, %v443
    %v445 = vlaneseq
    %v446 = vshrl.u32 %v445, 7
    %v447 = vsub.s32 2, %v446
    %v448 = vrot.slane %v429, %v447
    %v449 = vlaneseq
    %v450 = vshrl.u32 %v449, 7
    %v451 = vsub.s32 3, %v450
    %v452 = vrot.slane %v429, %v451
    %v453 = vlaneseq
    %v454 = vshrl.u32 %v453, 7
    %v455 = vsub.s32 4, %v454
    %v456 = vrot.slane %v429, %v455
    %v457 = vlaneseq
    %v458 = vshrl.u32 %v457, 7
    %v459 = vsub.s32 5, %v458
    %v460 = vrot.slane %v429, %v459
    %v755 = vunpack.c.l.b16 %v141
    %v756 = vunpack.c.h.b16 %v141
    %v757 = vunpack.c.l.b16 %v142
    %v758 = vunpack.c.h.b16 %v142
    %v759 = vunpack.c.l.b16 %v143
    %v760 = vunpack.c.h.b16 %v143
    %v761 = vunpack.c.l.b16 %v144
    %v762 = vunpack.c.h.b16 %v144
    %v763 = vunpack.c.l.b16 %v145
    %v764 = vunpack.c.h.b16 %v145
    %v765 = vunpack.c.l.b16 %v146
    %v766 = vunpack.c.h.b16 %v146
    %v767 = vunpack.c.l.b16 %v147
    %v768 = vunpack.c.h.b16 %v147
    %v769 = vunpack.c.l.b16 %v148
    %v770 = vunpack.c.h.b16 %v148
    %v771 = vunpack.c.l.b16 %v149
    %v772 = vunpack.c.h.b16 %v149
    %v773 = vunpack.c.l.b16 %v150
    %v774 = vunpack.c.h.b16 %v150
    %v775 = vunpack.c.l.b16 %v151
    %v776 = vunpack.c.h.b16 %v151
    %v777 = vunpack.c.l.b16 %v152
    %v778 = vunpack.c.h.b16 %v152
    %v779 = vunpack.c.l.b16 %v153
    %v780 = vunpack.c.h.b16 %v153
    %v781 = vunpack.c.l.b16 %v154
    %v782 = vunpack.c.h.b16 %v154
    %v783 = vunpack.c.l.b16 %v155
    %v784 = vunpack.c.h.b16 %v155
    %v785 = vunpack.c.l.b16 %v156
    %v786 = vunpack.c.h.b16 %v156
    %v787 = vunpack.c.l.b16 %v157
    %v788 = vunpack.c.h.b16 %v157
    %v789 = vunpack.c.l.b16 %v158
    %v790 = vunpack.c.h.b16 %v158
    %v791 = vunpack.c.l.b16 %v159
    %v792 = vunpack.c.h.b16 %v159
    %v793 = vunpack.c.l.b16 %v160
    %v794 = vunpack.c.h.b16 %v160
    %v795 = vunpack.c.l.b16 %v161
    %v796 = vunpack.c.h.b16 %v161
    %v797 = vunpack.c.l.b16 %v162
    %v798 = vunpack.c.h.b16 %v162
    %v799 = vunpack.c.l.b16 %v163
    %v800 = vunpack.c.h.b16 %v163
    %v801 = vunpack.c.l.b16 %v164
    %v802 = vunpack.c.h.b16 %v164
    %v803 = vunpack.c.l.b16 %v165
    %v804 = vunpack.c.h.b16 %v165
    %v805 = vunpack.c.l.b16 %v166
    %v806 = vunpack.c.h.b16 %v166
    %v807 = vunpack.c.l.b16 %v167
    %v808 = vunpack.c.h.b16 %v167
    %v809 = vunpack.c.l.b16 %v168
    %v810 = vunpack.c.h.b16 %v168
    %v811 = vunpack.c.l.b16 %v169
    %v812 = vunpack.c.h.b16 %v169
    %v813 = vunpack.c.l.b16 %v170
    %v814 = vunpack.c.h.b16 %v170
    %v815 = vunpack.c.l.b16 %v171
    %v816 = vunpack.c.h.b16 %v171
    %v817 = vunpack.c.l.b16 %v172
    %v818 = vunpack.c.h.b16 %v172
    %v819 = vunpack.c.l.b16 %v173
    %v820 = vunpack.c.h.b16 %v173
    %v821 = vunpack.c.l.b16 %v174
    %v822 = vunpack.c.h.b16 %v174
    %v823 = vunpack.c.l.b16 %v175
    %v824 = vunpack.c.h.b16 %v175
    %v825 = vunpack.c.l.b16 %v176
    %v826 = vunpack.c.h.b16 %v176
    %v827 = vunpack.c.l.b16 %v177
    %v828 = vunpack.c.h.b16 %v177
    %v829 = vunpack.c.l.b16 %v178
    %v830 = vunpack.c.h.b16 %v178
    %v831 = vunpack.c.l.b16 %v179
    %v832 = vunpack.c.h.b16 %v179
    %v833 = vunpack.c.l.b16 %v180
    %v834 = vunpack.c.h.b16 %v180
    %v835 = vunpack.c.l.b16 %v181
    %v836 = vunpack.c.h.b16 %v181
    %v837 = vunpack.c.l.b16 %v182
    %v838 = vunpack.c.h.b16 %v182
    %v839 = vunpack.c.l.b16 %v183
    %v840 = vunpack.c.h.b16 %v183
    %v841 = vunpack.c.l.b16 %v184
    %v842 = vunpack.c.h.b16 %v184
    %v843 = vunpack.c.l.b16 %v185
    %v844 = vunpack.c.h.b16 %v185
    %v845 = vunpack.c.l.b16 %v186
    %v846 = vunpack.c.h.b16 %v186
    %v847 = vunpack.c.l.b16 %v187
    %v848 = vunpack.c.h.b16 %v187
    %v849 = vunpack.c.l.b16 %v188
    %v850 = vunpack.c.h.b16 %v188
    %v851 = vunpack.c.l.b16 %v189
    %v852 = vunpack.c.h.b16 %v189
    %v853 = vunpack.c.l.b16 %v190
    %v854 = vunpack.c.h.b16 %v190
    %v855 = vunpack.c.l.b16 %v191
    %v856 = vunpack.c.h.b16 %v191
    %v857 = vunpack.c.l.b16 %v192
    %v858 = vunpack.c.h.b16 %v192
    %v859 = vunpack.c.l.b16 %v193
    %v860 = vunpack.c.h.b16 %v193
    %v861 = vunpack.c.l.b16 %v194
    %v862 = vunpack.c.h.b16 %v194
    %v863 = vunpack.c.l.b16 %v195
    %v864 = vunpack.c.h.b16 %v195
    %v865 = vunpack.c.l.b16 %v196
    %v866 = vunpack.c.h.b16 %v196
    %v867 = vunpack.c.l.b16 %v197
    %v868 = vunpack.c.h.b16 %v197
    %v869 = vunpack.c.l.b16 %v198
    %v870 = vunpack.c.h.b16 %v198
    %v871 = vunpack.c.l.b16 %v199
    %v872 = vunpack.c.h.b16 %v199
    %v873 = vunpack.c.l.b16 %v200
    %v874 = vunpack.c.h.b16 %v200
    %v875 = vunpack.c.l.b16 %v201
    %v876 = vunpack.c.h.b16 %v201
    %v877 = vunpack.c.l.b16 %v202
    %v878 = vunpack.c.h.b16 %v202
    %v879 = vunpack.c.l.b16 %v203
    %v880 = vunpack.c.h.b16 %v203
    %v881 = vunpack.c.l.b16 %v204
    %v882 = vunpack.c.h.b16 %v204
    %v883 = vunpack.c.l.b16 %v205
    %v884 = vunpack.c.h.b16 %v205
    %v885 = vunpack.c.l.b16 %v206
    %v886 = vunpack.c.h.b16 %v206
    %v887 = vunpack.c.l.b16 %v207
    %v888 = vunpack.c.h.b16 %v207
    %v889 = vunpack.c.l.b16 %v208
    %v890 = vunpack.c.h.b16 %v208
    %v891 = vunpack.c.l.b16 %v209
    %v892 = vunpack.c.h.b16 %v209
    %v893 = vunpack.c.l.b16 %v210
    %v894 = vunpack.c.h.b16 %v210
    %v895 = vunpack.c.l.b16 %v211
    %v896 = vunpack.c.h.b16 %v211
    %v897 = vunpack.c.l.b16 %v212
    %v898 = vunpack.c.h.b16 %v212
    %v899 = vunpack.c.l.b16 %v213
    %v900 = vunpack.c.h.b16 %v213
    %v901 = vunpack.c.l.b16 %v214
    %v902 = vunpack.c.h.b16 %v214
    %v903 = vunpack.c.l.b16 %v215
    %v904 = vunpack.c.h.b16 %v215
    %v905 = vunpack.c.l.b16 %v216
    %v906 = vunpack.c.h.b16 %v216
    %v907 = vunpack.c.l.b16 %v217
    %v908 = vunpack.c.h.b16 %v217
    %v909 = vunpack.c.l.b16 %v218
    %v910 = vunpack.c.h.b16 %v218
    %v911 = vunpack.c.l.b16 %v219
    %v912 = vunpack.c.h.b16 %v219
    %v913 = vunpack.c.l.b16 %v220
    %v914 = vunpack.c.h.b16 %v220
    %v915 = vunpack.c.l.b16 %v221
    %v916 = vunpack.c.h.b16 %v221
    %v917 = vunpack.c.l.b16 %v222
    %v918 = vunpack.c.h.b16 %v222
    %v919 = vunpack.c.l.b16 %v223
    %v920 = vunpack.c.h.b16 %v223
    %v921 = vunpack.c.l.b16 %v224
    %v922 = vunpack.c.h.b16 %v224
    %v923 = vunpack.c.l.b16 %v225
    %v924 = vunpack.c.h.b16 %v225
    %v925 = vunpack.c.l.b16 %v226
    %v926 = vunpack.c.h.b16 %v226
    %v927 = vunpack.c.l.b16 %v227
    %v928 = vunpack.c.h.b16 %v227
    %v929 = vunpack.c.l.b16 %v228
    %v930 = vunpack.c.h.b16 %v228
    %v931 = vunpack.c.l.b16 %v229
    %v932 = vunpack.c.h.b16 %v229
    %v933 = vunpack.c.l.b16 %v230
    %v934 = vunpack.c.h.b16 %v230
    %v935 = vunpack.c.l.b16 %v231
    %v936 = vunpack.c.h.b16 %v231
    %v937 = vunpack.c.l.b16 %v232
    %v938 = vunpack.c.h.b16 %v232
    %v939 = vunpack.c.l.b16 %v233
    %v940 = vunpack.c.h.b16 %v233
    %v941 = vunpack.c.l.b16 %v234
    %v942 = vunpack.c.h.b16 %v234
    %v943 = vunpack.c.l.b16 %v235
    %v944 = vunpack.c.h.b16 %v235
    %v945 = vunpack.c.l.b16 %v236
    %v946 = vunpack.c.h.b16 %v236
    %v947 = vunpack.c.l.b16 %v237
    %v948 = vunpack.c.h.b16 %v237
    %v949 = vunpack.c.l.b16 %v238
    %v950 = vunpack.c.h.b16 %v238
    %v951 = vunpack.c.l.b16 %v239
    %v952 = vunpack.c.h.b16 %v239
    %v953 = vunpack.c.l.b16 %v240
    %v954 = vunpack.c.h.b16 %v240
    %v955 = vunpack.c.l.b16 %v241
    %v956 = vunpack.c.h.b16 %v241
    %v957 = vunpack.c.l.b16 %v242
    %v958 = vunpack.c.h.b16 %v242
    %v959 = vunpack.c.l.b16 %v243
    %v960 = vunpack.c.h.b16 %v243
    %v961 = vunpack.c.l.b16 %v244
    %v962 = vunpack.c.h.b16 %v244
    %v963 = vunpack.c.l.b16 %v245
    %v964 = vunpack.c.h.b16 %v245
    %v965 = vunpack.c.l.b16 %v246
    %v966 = vunpack.c.h.b16 %v246
    %v967 = vunpack.c.l.b16 %v247
    %v968 = vunpack.c.h.b16 %v247
    %v969 = vunpack.c.l.b16 %v248
    %v970 = vunpack.c.h.b16 %v248
    %v971 = vunpack.c.l.b16 %v249
    %v972 = vunpack.c.h.b16 %v249
    %v973 = vunpack.c.l.b16 %v250
    %v974 = vunpack.c.h.b16 %v250
    %v975 = vunpack.c.l.b16 %v251
    %v976 = vunpack.c.h.b16 %v251
    %v977 = vunpack.c.l.b16 %v252
    %v978 = vunpack.c.h.b16 %v252
    %v979 = vunpack.c.l.b16 %v253
    %v980 = vunpack.c.h.b16 %v253
    %v981 = vunpack.c.l.b16 %v254
    %v982 = vunpack.c.h.b16 %v254
    %v983 = vunpack.c.l.b16 %v255
    %v984 = vunpack.c.h.b16 %v255
    %v985 = vunpack.c.l.b16 %v256
    %v986 = vunpack.c.h.b16 %v256
    %v987 = vunpack.c.l.b16 %v257
    %v988 = vunpack.c.h.b16 %v257
    %v989 = vunpack.c.l.b16 %v258
    %v990 = vunpack.c.h.b16 %v258
    %v991 = vunpack.c.l.b16 %v259
    %v992 = vunpack.c.h.b16 %v259
    %v993 = vunpack.c.l.b16 %v260
    %v994 = vunpack.c.h.b16 %v260
    %v995 = vunpack.c.l.b16 %v261
    %v996 = vunpack.c.h.b16 %v261
    %v997 = vunpack.c.l.b16 %v262
    %v998 = vunpack.c.h.b16 %v262
    %v999 = vunpack.c.l.b16 %v263
    %v1000 = vunpack.c.h.b16 %v263
    %v1001 = vunpack.c.l.b16 %v264
    %v1002 = vunpack.c.h.b16 %v264
    %v1003 = vunpack.c.l.b16 %v265
    %v1004 = vunpack.c.h.b16 %v265
    %v1005 = vunpack.c.l.b16 %v266
    %v1006 = vunpack.c.h.b16 %v266
    %v1007 = vunpack.c.l.b16 %v267
    %v1008 = vunpack.c.h.b16 %v267
    %v1009 = vunpack.c.l.b16 %v268
    %v1010 = vunpack.c.h.b16 %v268
    %v1011 = vunpack.c.l.b16 %v269
    %v1012 = vunpack.c.h.b16 %v269
    %v1013 = vunpack.c.l.b16 %v270
    %v1014 = vunpack.c.h.b16 %v270
    %v1015 = vunpack.c.l.b16 %v271
    %v1016 = vunpack.c.h.b16 %v271
    %v1017 = vunpack.c.l.b16 %v272
    %v1018 = vunpack.c.h.b16 %v272
    %v1019 = vunpack.c.l.b16 %v273
    %v1020 = vunpack.c.h.b16 %v273
    %v1021 = vunpack.c.l.b16 %v274
    %v1022 = vunpack.c.h.b16 %v274
    %v1023 = vunpack.c.l.b16 %v275
    %v1024 = vunpack.c.h.b16 %v275
    %v1025 = vunpack.c.l.b16 %v276
    %v1026 = vunpack.c.h.b16 %v276
    %v1027 = vunpack.c.l.b16 %v277
    %v1028 = vunpack.c.h.b16 %v277
    %v1029 = vunpack.c.l.b16 %v278
    %v1030 = vunpack.c.h.b16 %v278
    %v1031 = vunpack.c.l.b16 %v279
    %v1032 = vunpack.c.h.b16 %v279
    %v1033 = vunpack.c.l.b16 %v280
    %v1034 = vunpack.c.h.b16 %v280
    %v1035 = vunpack.c.l.b16 %v281
    %v1036 = vunpack.c.h.b16 %v281
    %v1037 = vunpack.c.l.b16 %v282
    %v1038 = vunpack.c.h.b16 %v282
    %v1039 = vunpack.c.l.b16 %v283
    %v1040 = vunpack.c.h.b16 %v283
    %v1041 = vunpack.c.l.b16 %v284
    %v1042 = vunpack.c.h.b16 %v284
    %v1043 = vunpack.c.l.b16 %v285
    %v1044 = vunpack.c.h.b16 %v285
    %v1045 = vunpack.c.l.b16 %v286
    %v1046 = vunpack.c.h.b16 %v286
    %v1047 = vunpack.c.l.b16 %v287
    %v1048 = vunpack.c.h.b16 %v287
    %v1049 = vunpack.c.l.b16 %v288
    %v1050 = vunpack.c.h.b16 %v288
    %v1051 = vunpack.c.l.b16 %v289
    %v1052 = vunpack.c.h.b16 %v289
    %v1053 = vunpack.c.l.b16 %v290
    %v1054 = vunpack.c.h.b16 %v290
    %v1055 = vunpack.c.l.b16 %v291
    %v1056 = vunpack.c.h.b16 %v291
    %v1057 = vunpack.c.l.b16 %v292
    %v1058 = vunpack.c.h.b16 %v292
    %v1059 = vunpack.c.l.b16 %v293
    %v1060 = vunpack.c.h.b16 %v293
    %v1061 = vunpack.c.l.b16 %v294
    %v1062 = vunpack.c.h.b16 %v294
    %v1063 = vunpack.c.l.b16 %v295
    %v1064 = vunpack.c.h.b16 %v295
    %v1065 = vunpack.c.l.b16 %v296
    %v1066 = vunpack.c.h.b16 %v296
    %v1067 = vunpack.c.l.b16 %v297
    %v1068 = vunpack.c.h.b16 %v297
    %v1069 = vunpack.c.l.b16 %v298
    %v1070 = vunpack.c.h.b16 %v298
    %v1071 = vunpack.c.l.b16 %v299
    %v1072 = vunpack.c.h.b16 %v299
    %v1073 = vunpack.c.l.b16 %v300
    %v1074 = vunpack.c.h.b16 %v300
    %v1075 = vunpack.c.l.b16 %v301
    %v1076 = vunpack.c.h.b16 %v301
    %v1077 = vunpack.c.l.b16 %v302
    %v1078 = vunpack.c.h.b16 %v302
    %v1079 = vunpack.c.l.b16 %v303
    %v1080 = vunpack.c.h.b16 %v303
    %v1081 = vunpack.c.l.b16 %v304
    %v1082 = vunpack.c.h.b16 %v304
    %v1083 = vunpack.c.l.b16 %v305
    %v1084 = vunpack.c.h.b16 %v305
    %v1085 = vunpack.c.l.b16 %v306
    %v1086 = vunpack.c.h.b16 %v306
    %v1087 = vunpack.c.l.b16 %v307
    %v1088 = vunpack.c.h.b16 %v307
    %v1089 = vunpack.c.l.b16 %v308
    %v1090 = vunpack.c.h.b16 %v308
    %v1091 = vunpack.c.l.b16 %v309
    %v1092 = vunpack.c.h.b16 %v309
    %v1093 = vunpack.c.l.b16 %v310
    %v1094 = vunpack.c.h.b16 %v310
    %v1095 = vunpack.c.l.b16 %v311
    %v1096 = vunpack.c.h.b16 %v311
    %v1097 = vunpack.c.l.b16 %v312
    %v1098 = vunpack.c.h.b16 %v312
    %v1099 = vunpack.c.l.b16 %v313
    %v1100 = vunpack.c.h.b16 %v313
    %v1101 = vunpack.c.l.b16 %v314
    %v1102 = vunpack.c.h.b16 %v314
    %v1103 = vunpack.c.l.b16 %v315
    %v1104 = vunpack.c.h.b16 %v315
    %v1105 = vunpack.c.l.b16 %v316
    %v1106 = vunpack.c.h.b16 %v316
    %v1107 = vunpack.c.l.b16 %v317
    %v1108 = vunpack.c.h.b16 %v317
    %v1109 = vunpack.c.l.b16 %v318
    %v1110 = vunpack.c.h.b16 %v318
    %v1111 = vunpack.c.l.b16 %v319
    %v1112 = vunpack.c.h.b16 %v319
    %v1113 = vunpack.c.l.b16 %v320
    %v1114 = vunpack.c.h.b16 %v320
    %v1115 = vunpack.c.l.b16 %v321
    %v1116 = vunpack.c.h.b16 %v321
    %v1117 = vunpack.c.l.b16 %v322
    %v1118 = vunpack.c.h.b16 %v322
    %v1119 = vunpack.c.l.b16 %v323
    %v1120 = vunpack.c.h.b16 %v323
    %v1121 = vunpack.c.l.b16 %v324
    %v1122 = vunpack.c.h.b16 %v324
    %v1123 = vunpack.c.l.b16 %v325
    %v1124 = vunpack.c.h.b16 %v325
    %v1125 = vunpack.c.l.b16 %v326
    %v1126 = vunpack.c.h.b16 %v326
    %v1127 = vunpack.c.l.b16 %v327
    %v1128 = vunpack.c.h.b16 %v327
    %v1129 = vunpack.c.l.b16 %v328
    %v1130 = vunpack.c.h.b16 %v328
    %v1131 = vunpack.c.l.b16 %v329
    %v1132 = vunpack.c.h.b16 %v329
    %v1133 = vunpack.c.l.b16 %v330
    %v1134 = vunpack.c.h.b16 %v330
    %v1135 = vunpack.c.l.b16 %v331
    %v1136 = vunpack.c.h.b16 %v331
    %v1137 = vunpack.c.l.b16 %v332
    %v1138 = vunpack.c.h.b16 %v332
    %v1139 = vunpack.c.l.b16 %v333
    %v1140 = vunpack.c.h.b16 %v333
    %v1141 = vunpack.c.l.b16 %v334
    %v1142 = vunpack.c.h.b16 %v334
    %v1143 = vunpack.c.l.b16 %v335
    %v1144 = vunpack.c.h.b16 %v335
    %v1145 = vunpack.c.l.b16 %v336
    %v1146 = vunpack.c.h.b16 %v336
    %v1147 = vunpack.c.l.b16 %v337
    %v1148 = vunpack.c.h.b16 %v337
    %v1149 = vunpack.c.l.b16 %v338
    %v1150 = vunpack.c.h.b16 %v338
    %v1151 = vunpack.c.l.b16 %v339
    %v1152 = vunpack.c.h.b16 %v339
    %v1153 = vunpack.c.l.b16 %v340
    %v1154 = vunpack.c.h.b16 %v340
    %v1155 = vunpack.c.l.b16 %v341
    %v1156 = vunpack.c.h.b16 %v341
    %v1157 = vunpack.c.l.b16 %v342
    %v1158 = vunpack.c.h.b16 %v342
    %v1159 = vunpack.c.l.b16 %v343
    %v1160 = vunpack.c.h.b16 %v343
    %v1161 = vunpack.c.l.b16 %v344
    %v1162 = vunpack.c.h.b16 %v344
    %v1163 = vunpack.c.l.b16 %v345
    %v1164 = vunpack.c.h.b16 %v345
    %v1165 = vunpack.c.l.b16 %v346
    %v1166 = vunpack.c.h.b16 %v346
    %v1167 = vunpack.c.l.b16 %v347
    %v1168 = vunpack.c.h.b16 %v347
    %v1169 = vunpack.c.l.b16 %v348
    %v1170 = vunpack.c.h.b16 %v348
    %v1171 = vunpack.c.l.b16 %v349
    %v1172 = vunpack.c.h.b16 %v349
    %v1173 = vunpack.c.l.b16 %v350
    %v1174 = vunpack.c.h.b16 %v350
    %v1175 = vunpack.c.l.b16 %v351
    %v1176 = vunpack.c.h.b16 %v351
    %v1177 = vunpack.c.l.b16 %v352
    %v1178 = vunpack.c.h.b16 %v352
    %v1179 = vunpack.c.l.b16 %v353
    %v1180 = vunpack.c.h.b16 %v353
    %v1181 = vunpack.c.l.b16 %v354
    %v1182 = vunpack.c.h.b16 %v354
    %v1183 = vunpack.c.l.b16 %v355
    %v1184 = vunpack.c.h.b16 %v355
    %v1185 = vunpack.c.l.b16 %v356
    %v1186 = vunpack.c.h.b16 %v356
    %v1187 = vunpack.c.l.b16 %v357
    %v1188 = vunpack.c.h.b16 %v357
    %v1189 = vunpack.c.l.b16 %v358
    %v1190 = vunpack.c.h.b16 %v358
    %v1191 = vunpack.c.l.b16 %v359
    %v1192 = vunpack.c.h.b16 %v359
    %v1193 = vunpack.c.l.b16 %v360
    %v1194 = vunpack.c.h.b16 %v360
    %v1195 = vunpack.c.l.b16 %v361
    %v1196 = vunpack.c.h.b16 %v361
    %v1197 = vunpack.c.l.b16 %v362
    %v1198 = vunpack.c.h.b16 %v362
    %v1199 = vunpack.c.l.b16 %v363
    %v1200 = vunpack.c.h.b16 %v363
    %v1201 = vunpack.c.l.b16 %v364
    %v1202 = vunpack.c.h.b16 %v364
    %v1203 = vunpack.c.l.b16 %v365
    %v1204 = vunpack.c.h.b16 %v365
    %v1205 = vunpack.c.l.b16 %v366
    %v1206 = vunpack.c.h.b16 %v366
    %v1207 = vunpack.c.l.b16 %v367
    %v1208 = vunpack.c.h.b16 %v367
    %v1209 = vunpack.c.l.b16 %v368
    %v1210 = vunpack.c.h.b16 %v368
    %v1211 = vunpack.c.l.b16 %v369
    %v1212 = vunpack.c.h.b16 %v369
    %v1213 = vunpack.c.l.b16 %v370
    %v1214 = vunpack.c.h.b16 %v370
    %v1215 = vunpack.c.l.b16 %v371
    %v1216 = vunpack.c.h.b16 %v371
    %v1217 = vunpack.c.l.b16 %v372
    %v1218 = vunpack.c.h.b16 %v372
    %v1219 = vunpack.c.l.b16 %v373
    %v1220 = vunpack.c.h.b16 %v373
    %v1221 = vunpack.c.l.b16 %v374
    %v1222 = vunpack.c.h.b16 %v374
    %v1223 = vunpack.c.l.b16 %v375
    %v1224 = vunpack.c.h.b16 %v375
    %v1225 = vunpack.c.l.b16 %v376
    %v1226 = vunpack.c.h.b16 %v376
    %v1227 = vunpack.c.l.b16 %v377
    %v1228 = vunpack.c.h.b16 %v377
    %v1229 = vunpack.c.l.b16 %v378
    %v1230 = vunpack.c.h.b16 %v378
    %v1231 = vunpack.c.l.b16 %v379
    %v1232 = vunpack.c.h.b16 %v379
    %v1233 = vunpack.c.l.b16 %v380
    %v1234 = vunpack.c.h.b16 %v380
    %v1235 = vunpack.c.l.b16 %v381
    %v1236 = vunpack.c.h.b16 %v381
    %v1237 = vunpack.c.l.b16 %v382
    %v1238 = vunpack.c.h.b16 %v382
    %v1239 = vunpack.c.l.b16 %v383
    %v1240 = vunpack.c.h.b16 %v383
    %v1241 = vunpack.c.l.b16 %v384
    %v1242 = vunpack.c.h.b16 %v384
    %v1243 = vunpack.c.l.b16 %v385
    %v1244 = vunpack.c.h.b16 %v385
    %v1245 = vunpack.c.l.b16 %v386
    %v1246 = vunpack.c.h.b16 %v386
    %v1247 = vunpack.c.l.b16 %v387
    %v1248 = vunpack.c.h.b16 %v387
    %v1249 = vunpack.c.l.b16 %v388
    %v1250 = vunpack.c.h.b16 %v388
    %v1251 = vunpack.c.l.b16 %v389
    %v1252 = vunpack.c.h.b16 %v389
    %v1253 = vunpack.c.l.b16 %v390
    %v1254 = vunpack.c.h.b16 %v390
    %v1255 = vunpack.c.l.b16 %v391
    %v1256 = vunpack.c.h.b16 %v391
    %v1257 = vunpack.c.l.b16 %v392
    %v1258 = vunpack.c.h.b16 %v392
    %v1259 = vunpack.c.l.b16 %v393
    %v1260 = vunpack.c.h.b16 %v393
    %v1261 = vunpack.c.l.b16 %v394
    %v1262 = vunpack.c.h.b16 %v394
    %v1263 = vunpack.c.l.b16 %v395
    %v1264 = vunpack.c.h.b16 %v395
    %v1265 = vunpack.c.l.b16 %v396
    %v1266 = vunpack.c.h.b16 %v396
    %v1267 = vunpack.c.l.b16 %v397
    %v1268 = vunpack.c.h.b16 %v397
    %v1269 = vunpack.c.l.b16 %v398
    %v1270 = vunpack.c.h.b16 %v398
    %v1271 = vunpack.c.l.b16 %v399
    %v1272 = vunpack.c.h.b16 %v399
    %v1273 = vunpack.c.l.b16 %v400
    %v1274 = vunpack.c.h.b16 %v400
    %v1275 = vunpack.c.l.b16 %v401
    %v1276 = vunpack.c.h.b16 %v401
    %v1277 = vunpack.c.l.b16 %v402
    %v1278 = vunpack.c.h.b16 %v402
    %v1279 = vunpack.c.l.b16 %v403
    %v1280 = vunpack.c.h.b16 %v403
    %v1281 = vunpack.c.l.b16 %v404
    %v1282 = vunpack.c.h.b16 %v404
    %v1283 = vunpack.c.l.b16 %v405
    %v1284 = vunpack.c.h.b16 %v405
    %v1285 = vunpack.c.l.b16 %v406
    %v1286 = vunpack.c.h.b16 %v406
    %v1287 = vunpack.c.l.b16 %v407
    %v1288 = vunpack.c.h.b16 %v407
    %v1289 = vunpack.c.l.b16 %v408
    %v1290 = vunpack.c.h.b16 %v408
    %v1291 = vunpack.c.l.b16 %v409
    %v1292 = vunpack.c.h.b16 %v409
    %v1293 = vunpack.c.l.b16 %v410
    %v1294 = vunpack.c.h.b16 %v410
    %v1295 = vunpack.c.l.b16 %v411
    %v1296 = vunpack.c.h.b16 %v411
    %v1297 = vunpack.c.l.b16 %v412
    %v1298 = vunpack.c.h.b16 %v412
    %v1299 = vunpack.c.l.b16 %v413
    %v1300 = vunpack.c.h.b16 %v413
    %v1301 = vunpack.c.l.b16 %v414
    %v1302 = vunpack.c.h.b16 %v414
    %v1303 = vunpack.c.l.b16 %v415
    %v1304 = vunpack.c.h.b16 %v415
    %v1305 = vunpack.c.l.b16 %v416
    %v1306 = vunpack.c.h.b16 %v416
    %v1307 = vunpack.c.l.b16 %v417
    %v1308 = vunpack.c.h.b16 %v417
    %v1309 = vunpack.c.l.b16 %v418
    %v1310 = vunpack.c.h.b16 %v418
    %v1311 = vunpack.c.l.b16 %v419
    %v1312 = vunpack.c.h.b16 %v419
    %v1313 = vunpack.c.l.b16 %v420
    %v1314 = vunpack.c.h.b16 %v420
    %v1315 = vunpack.c.l.b16 %v421
    %v1316 = vunpack.c.h.b16 %v421
    %v1317 = vunpack.c.l.b16 %v422
    %v1318 = vunpack.c.h.b16 %v422
    %v1319 = vunpack.c.l.b16 %v423
    %v1320 = vunpack.c.h.b16 %v423
    %v1321 = vunpack.c.l.b16 %v424
    %v1322 = vunpack.c.h.b16 %v424
    %v1323 = vunpack.c.l.b16 %v425
    %v1324 = vunpack.c.h.b16 %v425
    %v1325 = vunpack.c.l.b16 %v426
    %v1326 = vunpack.c.h.b16 %v426
    %v1327 = vunpack.c.l.b16 %v427
    %v1328 = vunpack.c.h.b16 %v427
    %v1329 = vunpack.c.l.b16 %v428
    %v1330 = vunpack.c.h.b16 %v428
    %v1331 = vpack.c.b16 %v761, %v755
    %v1332 = vpack.c.b16 %v762, %v756
    %v1333 = vpack.c.b16 %v763, %v757
    %v1334 = vpack.c.b16 %v764, %v758
    %v1335 = vpack.c.b16 %v765, %v759
    %v1336 = vpack.c.b16 %v766, %v760
    %v1337 = vpack.c.b16 %v773, %v767
    %v1338 = vpack.c.b16 %v774, %v768
    %v1339 = vpack.c.b16 %v775, %v769
    %v1340 = vpack.c.b16 %v776, %v770
    %v1341 = vpack.c.b16 %v777, %v771
    %v1342 = vpack.c.b16 %v778, %v772
    %v1343 = vpack.c.b16 %v785, %v779
    %v1344 = vpack.c.b16 %v786, %v780
    %v1345 = vpack.c.b16 %v787, %v781
    %v1346 = vpack.c.b16 %v788, %v782
    %v1347 = vpack.c.b16 %v789, %v783
    %v1348 = vpack.c.b16 %v790, %v784
    %v1349 = vpack.c.b16 %v797, %v791
    %v1350 = vpack.c.b16 %v798, %v792
    %v1351 = vpack.c.b16 %v799, %v793
    %v1352 = vpack.c.b16 %v800, %v794
    %v1353 = vpack.c.b16 %v801, %v795
    %v1354 = vpack.c.b16 %v802, %v796
    %v1355 = vpack.c.b16 %v809, %v803
    %v1356 = vpack.c.b16 %v810, %v804
    %v1357 = vpack.c.b16 %v811, %v805
    %v1358 = vpack.c.b16 %v812, %v806
    %v1359 = vpack.c.b16 %v813, %v807
    %v1360 = vpack.c.b16 %v814, %v808
    %v1361 = vpack.c.b16 %v821, %v815
    %v1362 = vpack.c.b16 %v822, %v816
    %v1363 = vpack.c.b16 %v823, %v817
    %v1364 = vpack.c.b16 %v824, %v818
    %v1365 = vpack.c.b16 %v825, %v819
    %v1366 = vpack.c.b16 %v826, %v820
    %v1367 = vpack.c.b16 %v833, %v827
    %v1368 = vpack.c.b16 %v834, %v828
    %v1369 = vpack.c.b16 %v835, %v829
    %v1370 = vpack.c.b16 %v836, %v830
    %v1371 = vpack.c.b16 %v837, %v831
    %v1372 = vpack.c.b16 %v838, %v832
    %v1373 = vpack.c.b16 %v845, %v839
    %v1374 = vpack.c.b16 %v846, %v840
    %v1375 = vpack.c.b16 %v847, %v841
    %v1376 = vpack.c.b16 %v848, %v842
    %v1377 = vpack.c.b16 %v849, %v843
    %v1378 = vpack.c.b16 %v850, %v844
    %v1379 = vpack.c.b16 %v857, %v851
    %v1380 = vpack.c.b16 %v858, %v852
    %v1381 = vpack.c.b16 %v859, %v853
    %v1382 = vpack.c.b16 %v860, %v854
    %v1383 = vpack.c.b16 %v861, %v855
    %v1384 = vpack.c.b16 %v862, %v856
    %v1385 = vpack.c.b16 %v869, %v863
    %v1386 = vpack.c.b16 %v870, %v864
    %v1387 = vpack.c.b16 %v871, %v865
    %v1388 = vpack.c.b16 %v872, %v866
    %v1389 = vpack.c.b16 %v873, %v867
    %v1390 = vpack.c.b16 %v874, %v868
    %v1391 = vpack.c.b16 %v881, %v875
    %v1392 = vpack.c.b16 %v882, %v876
    %v1393 = vpack.c.b16 %v883, %v877
    %v1394 = vpack.c.b16 %v884, %v878
    %v1395 = vpack.c.b16 %v885, %v879
    %v1396 = vpack.c.b16 %v886, %v880
    %v1397 = vpack.c.b16 %v893, %v887
    %v1398 = vpack.c.b16 %v894, %v888
    %v1399 = vpack.c.b16 %v895, %v889
    %v1400 = vpack.c.b16 %v896, %v890
    %v1401 = vpack.c.b16 %v897, %v891
    %v1402 = vpack.c.b16 %v898, %v892
    %v1403 = vpack.c.b16 %v905, %v899
    %v1404 = vpack.c.b16 %v906, %v900
    %v1405 = vpack.c.b16 %v907, %v901
    %v1406 = vpack.c.b16 %v908, %v902
    %v1407 = vpack.c.b16 %v909, %v903
    %v1408 = vpack.c.b16 %v910, %v904
    %v1409 = vpack.c.b16 %v917, %v911
    %v1410 = vpack.c.b16 %v918, %v912
    %v1411 = vpack.c.b16 %v919, %v913
    %v1412 = vpack.c.b16 %v920, %v914
    %v1413 = vpack.c.b16 %v921, %v915
    %v1414 = vpack.c.b16 %v922, %v916
    %v1415 = vpack.c.b16 %v929, %v923
    %v1416 = vpack.c.b16 %v930, %v924
    %v1417 = vpack.c.b16 %v931, %v925
    %v1418 = vpack.c.b16 %v932, %v926
    %v1419 = vpack.c.b16 %v933, %v927
    %v1420 = vpack.c.b16 %v934, %v928
    %v1421 = vpack.c.b16 %v941, %v935
    %v1422 = vpack.c.b16 %v942, %v936
    %v1423 = vpack.c.b16 %v943, %v937
    %v1424 = vpack.c.b16 %v944, %v938
    %v1425 = vpack.c.b16 %v945, %v939
    %v1426 = vpack.c.b16 %v946, %v940
    %v1427 = vpack.c.b16 %v953, %v947
    %v1428 = vpack.c.b16 %v954, %v948
    %v1429 = vpack.c.b16 %v955, %v949
    %v1430 = vpack.c.b16 %v956, %v950
    %v1431 = vpack.c.b16 %v957, %v951
    %v1432 = vpack.c.b16 %v958, %v952
    %v1433 = vpack.c.b16 %v965, %v959
    %v1434 = vpack.c.b16 %v966, %v960
    %v1435 = vpack.c.b16 %v967, %v961
    %v1436 = vpack.c.b16 %v968, %v962
    %v1437 = vpack.c.b16 %v969, %v963
    %v1438 = vpack.c.b16 %v970, %v964
    %v1439 = vpack.c.b16 %v977, %v971
    %v1440 = vpack.c.b16 %v978, %v972
    %v1441 = vpack.c.b16 %v979, %v973
    %v1442 = vpack.c.b16 %v980, %v974
    %v1443 = vpack.c.b16 %v981, %v975
    %v1444 = vpack.c.b16 %v982, %v976
    %v1445 = vpack.c.b16 %v989, %v983
    %v1446 = vpack.c.b16 %v990, %v984
    %v1447 = vpack.c.b16 %v991, %v985
    %v1448 = vpack.c.b16 %v992, %v986
    %v1449 = vpack.c.b16 %v993, %v987
    %v1450 = vpack.c.b16 %v994, %v988
    %v1451 = vpack.c.b16 %v1001, %v995
    %v1452 = vpack.c.b16 %v1002, %v996
    %v1453 = vpack.c.b16 %v1003, %v997
    %v1454 = vpack.c.b16 %v1004, %v998
    %v1455 = vpack.c.b16 %v1005, %v999
    %v1456 = vpack.c.b16 %v1006, %v1000
    %v1457 = vpack.c.b16 %v1013, %v1007
    %v1458 = vpack.c.b16 %v1014, %v1008
    %v1459 = vpack.c.b16 %v1015, %v1009
    %v1460 = vpack.c.b16 %v1016, %v1010
    %v1461 = vpack.c.b16 %v1017, %v1011
    %v1462 = vpack.c.b16 %v1018, %v1012
    %v1463 = vpack.c.b16 %v1025, %v1019
    %v1464 = vpack.c.b16 %v1026, %v1020
    %v1465 = vpack.c.b16 %v1027, %v1021
    %v1466 = vpack.c.b16 %v1028, %v1022
    %v1467 = vpack.c.b16 %v1029, %v1023
    %v1468 = vpack.c.b16 %v1030, %v1024
    %v1469 = vpack.c.b16 %v1037, %v1031
    %v1470 = vpack.c.b16 %v1038, %v1032
    %v1471 = vpack.c.b16 %v1039, %v1033
    %v1472 = vpack.c.b16 %v1040, %v1034
    %v1473 = vpack.c.b16 %v1041, %v1035
    %v1474 = vpack.c.b16 %v1042, %v1036
    %v1475 = vpack.c.b16 %v1049, %v1043
    %v1476 = vpack.c.b16 %v1050, %v1044
    %v1477 = vpack.c.b16 %v1051, %v1045
    %v1478 = vpack.c.b16 %v1052, %v1046
    %v1479 = vpack.c.b16 %v1053, %v1047
    %v1480 = vpack.c.b16 %v1054, %v1048
    %v1481 = vpack.c.b16 %v1061, %v1055
    %v1482 = vpack.c.b16 %v1062, %v1056
    %v1483 = vpack.c.b16 %v1063, %v1057
    %v1484 = vpack.c.b16 %v1064, %v1058
    %v1485 = vpack.c.b16 %v1065, %v1059
    %v1486 = vpack.c.b16 %v1066, %v1060
    %v1487 = vpack.c.b16 %v1073, %v1067
    %v1488 = vpack.c.b16 %v1074, %v1068
    %v1489 = vpack.c.b16 %v1075, %v1069
    %v1490 = vpack.c.b16 %v1076, %v1070
    %v1491 = vpack.c.b16 %v1077, %v1071
    %v1492 = vpack.c.b16 %v1078, %v1072
    %v1493 = vpack.c.b16 %v1085, %v1079
    %v1494 = vpack.c.b16 %v1086, %v1080
    %v1495 = vpack.c.b16 %v1087, %v1081
    %v1496 = vpack.c.b16 %v1088, %v1082
    %v1497 = vpack.c.b16 %v1089, %v1083
    %v1498 = vpack.c.b16 %v1090, %v1084
    %v1499 = vpack.c.b16 %v1097, %v1091
    %v1500 = vpack.c.b16 %v1098, %v1092
    %v1501 = vpack.c.b16 %v1099, %v1093
    %v1502 = vpack.c.b16 %v1100, %v1094
    %v1503 = vpack.c.b16 %v1101, %v1095
    %v1504 = vpack.c.b16 %v1102, %v1096
    %v1505 = vpack.c.b16 %v1109, %v1103
    %v1506 = vpack.c.b16 %v1110, %v1104
    %v1507 = vpack.c.b16 %v1111, %v1105
    %v1508 = vpack.c.b16 %v1112, %v1106
    %v1509 = vpack.c.b16 %v1113, %v1107
    %v1510 = vpack.c.b16 %v1114, %v1108
    %v1511 = vpack.c.b16 %v1121, %v1115
    %v1512 = vpack.c.b16 %v1122, %v1116
    %v1513 = vpack.c.b16 %v1123, %v1117
    %v1514 = vpack.c.b16 %v1124, %v1118
    %v1515 = vpack.c.b16 %v1125, %v1119
    %v1516 = vpack.c.b16 %v1126, %v1120
    %v1517 = vpack.c.b16 %v1133, %v1127
    %v1518 = vpack.c.b16 %v1134, %v1128
    %v1519 = vpack.c.b16 %v1135, %v1129
    %v1520 = vpack.c.b16 %v1136, %v1130
    %v1521 = vpack.c.b16 %v1137, %v1131
    %v1522 = vpack.c.b16 %v1138, %v1132
    %v1523 = vpack.c.b16 %v1145, %v1139
    %v1524 = vpack.c.b16 %v1146, %v1140
    %v1525 = vpack.c.b16 %v1147, %v1141
    %v1526 = vpack.c.b16 %v1148, %v1142
    %v1527 = vpack.c.b16 %v1149, %v1143
    %v1528 = vpack.c.b16 %v1150, %v1144
    %v1529 = vpack.c.b16 %v1157, %v1151
    %v1530 = vpack.c.b16 %v1158, %v1152
    %v1531 = vpack.c.b16 %v1159, %v1153
    %v1532 = vpack.c.b16 %v1160, %v1154
    %v1533 = vpack.c.b16 %v1161, %v1155
    %v1534 = vpack.c.b16 %v1162, %v1156
    %v1535 = vpack.c.b16 %v1169, %v1163
    %v1536 = vpack.c.b16 %v1170, %v1164
    %v1537 = vpack.c.b16 %v1171, %v1165
    %v1538 = vpack.c.b16 %v1172, %v1166
    %v1539 = vpack.c.b16 %v1173, %v1167
    %v1540 = vpack.c.b16 %v1174, %v1168
    %v1541 = vpack.c.b16 %v1181, %v1175
    %v1542 = vpack.c.b16 %v1182, %v1176
    %v1543 = vpack.c.b16 %v1183, %v1177
    %v1544 = vpack.c.b16 %v1184, %v1178
    %v1545 = vpack.c.b16 %v1185, %v1179
    %v1546 = vpack.c.b16 %v1186, %v1180
    %v1547 = vpack.c.b16 %v1193, %v1187
    %v1548 = vpack.c.b16 %v1194, %v1188
    %v1549 = vpack.c.b16 %v1195, %v1189
    %v1550 = vpack.c.b16 %v1196, %v1190
    %v1551 = vpack.c.b16 %v1197, %v1191
    %v1552 = vpack.c.b16 %v1198, %v1192
    %v1553 = vpack.c.b16 %v1205, %v1199
    %v1554 = vpack.c.b16 %v1206, %v1200
    %v1555 = vpack.c.b16 %v1207, %v1201
    %v1556 = vpack.c.b16 %v1208, %v1202
    %v1557 = vpack.c.b16 %v1209, %v1203
    %v1558 = vpack.c.b16 %v1210, %v1204
    %v1559 = vpack.c.b16 %v1217, %v1211
    %v1560 = vpack.c.b16 %v1218, %v1212
    %v1561 = vpack.c.b16 %v1219, %v1213
    %v1562 = vpack.c.b16 %v1220, %v1214
    %v1563 = vpack.c.b16 %v1221, %v1215
    %v1564 = vpack.c.b16 %v1222, %v1216
    %v1565 = vpack.c.b16 %v1229, %v1223
    %v1566 = vpack.c.b16 %v1230, %v1224
    %v1567 = vpack.c.b16 %v1231, %v1225
    %v1568 = vpack.c.b16 %v1232, %v1226
    %v1569 = vpack.c.b16 %v1233, %v1227
    %v1570 = vpack.c.b16 %v1234, %v1228
    %v1571 = vpack.c.b16 %v1241, %v1235
    %v1572 = vpack.c.b16 %v1242, %v1236
    %v1573 = vpack.c.b16 %v1243, %v1237
    %v1574 = vpack.c.b16 %v1244, %v1238
    %v1575 = vpack.c.b16 %v1245, %v1239
    %v1576 = vpack.c.b16 %v1246, %v1240
    %v1577 = vpack.c.b16 %v1253, %v1247
    %v1578 = vpack.c.b16 %v1254, %v1248
    %v1579 = vpack.c.b16 %v1255, %v1249
    %v1580 = vpack.c.b16 %v1256, %v1250
    %v1581 = vpack.c.b16 %v1257, %v1251
    %v1582 = vpack.c.b16 %v1258, %v1252
    %v1583 = vpack.c.b16 %v1265, %v1259
    %v1584 = vpack.c.b16 %v1266, %v1260
    %v1585 = vpack.c.b16 %v1267, %v1261
    %v1586 = vpack.c.b16 %v1268, %v1262
    %v1587 = vpack.c.b16 %v1269, %v1263
    %v1588 = vpack.c.b16 %v1270, %v1264
    %v1589 = vpack.c.b16 %v1277, %v1271
    %v1590 = vpack.c.b16 %v1278, %v1272
    %v1591 = vpack.c.b16 %v1279, %v1273
    %v1592 = vpack.c.b16 %v1280, %v1274
    %v1593 = vpack.c.b16 %v1281, %v1275
    %v1594 = vpack.c.b16 %v1282, %v1276
    %v1595 = vpack.c.b16 %v1289, %v1283
    %v1596 = vpack.c.b16 %v1290, %v1284
    %v1597 = vpack.c.b16 %v1291, %v1285
    %v1598 = vpack.c.b16 %v1292, %v1286
    %v1599 = vpack.c.b16 %v1293, %v1287
    %v1600 = vpack.c.b16 %v1294, %v1288
    %v1601 = vpack.c.b16 %v1301, %v1295
    %v1602 = vpack.c.b16 %v1302, %v1296
    %v1603 = vpack.c.b16 %v1303, %v1297
    %v1604 = vpack.c.b16 %v1304, %v1298
    %v1605 = vpack.c.b16 %v1305, %v1299
    %v1606 = vpack.c.b16 %v1306, %v1300
    %v1607 = vpack.c.b16 %v1313, %v1307
    %v1608 = vpack.c.b16 %v1314, %v1308
    %v1609 = vpack.c.b16 %v1315, %v1309
    %v1610 = vpack.c.b16 %v1316, %v1310
    %v1611 = vpack.c.b16 %v1317, %v1311
    %v1612 = vpack.c.b16 %v1318, %v1312
    %v1613 = vpack.c.b16 %v1325, %v1319
    %v1614 = vpack.c.b16 %v1326, %v1320
    %v1615 = vpack.c.b16 %v1327, %v1321
    %v1616 = vpack.c.b16 %v1328, %v1322
    %v1617 = vpack.c.b16 %v1329, %v1323
    %v1618 = vpack.c.b16 %v1330, %v1324
    %1907 = vmatprep.subr.bf16.mxu0 %v1332
    %1908 = vmatpush1.bf16.msra.mxu0 %v1331
    %1909 = vmatprep.subr.bf16.mxu0 %v1338
    %1910 = vmatpush1.bf16.msra.mxu0 %v1337
    %1911 = vmatprep.subr.bf16.mxu0 %v1344
    %1912 = vmatpush1.bf16.msra.mxu0 %v1343
    %1913 = vmatprep.subr.bf16.mxu0 %v1350
    %1914 = vmatpush1.bf16.msra.mxu0 %v1349
    %1915 = vmatprep.subr.bf16.mxu0 %v1356
    %1916 = vmatpush1.bf16.msra.mxu0 %v1355
    %1917 = vmatprep.subr.bf16.mxu0 %v1362
    %1918 = vmatpush1.bf16.msra.mxu0 %v1361
    %1919 = vmatprep.subr.bf16.mxu0 %v1368
    %1920 = vmatpush1.bf16.msra.mxu0 %v1367
    %1921 = vmatprep.subr.bf16.mxu0 %v1374
    %1922 = vmatpush1.bf16.msra.mxu0 %v1373
    %1923 = vmatprep.subr.bf16.mxu0 %v1380
    %1924 = vmatpush1.bf16.msra.mxu0 %v1379
    %1925 = vmatprep.subr.bf16.mxu0 %v1386
    %1926 = vmatpush1.bf16.msra.mxu0 %v1385
    %1927 = vmatprep.subr.bf16.mxu0 %v1392
    %1928 = vmatpush1.bf16.msra.mxu0 %v1391
    %1929 = vmatprep.subr.bf16.mxu0 %v1398
    %1930 = vmatpush1.bf16.msra.mxu0 %v1397
    %1931 = vmatprep.subr.bf16.mxu0 %v1404
    %1932 = vmatpush1.bf16.msra.mxu0 %v1403
    %1933 = vmatprep.subr.bf16.mxu0 %v1410
    %1934 = vmatpush1.bf16.msra.mxu0 %v1409
    %1935 = vmatprep.subr.bf16.mxu0 %v1416
    %1936 = vmatpush1.bf16.msra.mxu0 %v1415
    %1937 = vmatprep.subr.bf16.mxu0 %v1422
    %1938 = vmatpush1.bf16.msra.mxu0 %v1421
    %1939 = vmatprep.mubr.bf16.mxu0 %v431
    %1940 = vmatmul.mubr.bf16.gmra.mrb[0].mxu0 %v430
    %v1941 = vpop.f32.mrb[0].mxu0
    %v1942 = vadd.f32 %v440, %v1941
    %v1943 = vpop.f32.mrb[0].mxu0
    %v1944 = vadd.f32 %v444, %v1943
    %v1945 = vpop.f32.mrb[0].mxu0
    %v1946 = vpop.f32.mrb[0].mxu0
    %1947 = vdwg.mxu0
    %1948 = vmatprep.subr.bf16.mxu0 %v1428
    %1949 = vmatpush1.bf16.msra.mxu0 %v1427
    %1950 = vmatprep.subr.bf16.mxu0 %v1434
    %1951 = vmatpush1.bf16.msra.mxu0 %v1433
    %1952 = vmatprep.subr.bf16.mxu0 %v1440
    %1953 = vmatpush1.bf16.msra.mxu0 %v1439
    %1954 = vmatprep.subr.bf16.mxu0 %v1446
    %1955 = vmatpush1.bf16.msra.mxu0 %v1445
    %1956 = vmatprep.subr.bf16.mxu0 %v1452
    %1957 = vmatpush1.bf16.msra.mxu0 %v1451
    %1958 = vmatprep.subr.bf16.mxu0 %v1458
    %1959 = vmatpush1.bf16.msra.mxu0 %v1457
    %1960 = vmatprep.subr.bf16.mxu0 %v1464
    %1961 = vmatpush1.bf16.msra.mxu0 %v1463
    %1962 = vmatprep.subr.bf16.mxu0 %v1470
    %1963 = vmatpush1.bf16.msra.mxu0 %v1469
    %1964 = vmatprep.subr.bf16.mxu0 %v1476
    %1965 = vmatpush1.bf16.msra.mxu0 %v1475
    %1966 = vmatprep.subr.bf16.mxu0 %v1482
    %1967 = vmatpush1.bf16.msra.mxu0 %v1481
    %1968 = vmatprep.subr.bf16.mxu0 %v1488
    %1969 = vmatpush1.bf16.msra.mxu0 %v1487
    %1970 = vmatprep.subr.bf16.mxu0 %v1494
    %1971 = vmatpush1.bf16.msra.mxu0 %v1493
    %1972 = vmatprep.subr.bf16.mxu0 %v1500
    %1973 = vmatpush1.bf16.msra.mxu0 %v1499
    %1974 = vmatprep.subr.bf16.mxu0 %v1506
    %1975 = vmatpush1.bf16.msra.mxu0 %v1505
    %1976 = vmatprep.subr.bf16.mxu0 %v1512
    %1977 = vmatpush1.bf16.msra.mxu0 %v1511
    %1978 = vmatprep.subr.bf16.mxu0 %v1518
    %1979 = vmatpush1.bf16.msra.mxu0 %v1517
    %1980 = vmatprep.mubr.bf16.mxu0 %v433
    %1981 = vmatmul.mubr.bf16.gmra.mrb[0].mxu0 %v432
    %v1982 = vpop.f32.mrb[0].mxu0
    %v1983 = vadd.f32 %v1942, %v1982
    %v1984 = vpop.f32.mrb[0].mxu0
    %v1985 = vadd.f32 %v1944, %v1984
    %v1986 = vpop.f32.mrb[0].mxu0
    %v1987 = vpop.f32.mrb[0].mxu0
    %1988 = vdwg.mxu0
    %1989 = vmatprep.subr.bf16.mxu0 %v1524
    %1990 = vmatpush1.bf16.msra.mxu0 %v1523
    %1991 = vmatprep.subr.bf16.mxu0 %v1530
    %1992 = vmatpush1.bf16.msra.mxu0 %v1529
    %1993 = vmatprep.subr.bf16.mxu0 %v1536
    %1994 = vmatpush1.bf16.msra.mxu0 %v1535
    %1995 = vmatprep.subr.bf16.mxu0 %v1542
    %1996 = vmatpush1.bf16.msra.mxu0 %v1541
    %1997 = vmatprep.subr.bf16.mxu0 %v1548
    %1998 = vmatpush1.bf16.msra.mxu0 %v1547
    %1999 = vmatprep.subr.bf16.mxu0 %v1554
    %2000 = vmatpush1.bf16.msra.mxu0 %v1553
    %2001 = vmatprep.subr.bf16.mxu0 %v1560
    %2002 = vmatpush1.bf16.msra.mxu0 %v1559
    %2003 = vmatprep.subr.bf16.mxu0 %v1566
    %2004 = vmatpush1.bf16.msra.mxu0 %v1565
    %2005 = vmatprep.subr.bf16.mxu0 %v1572
    %2006 = vmatpush1.bf16.msra.mxu0 %v1571
    %2007 = vmatprep.subr.bf16.mxu0 %v1578
    %2008 = vmatpush1.bf16.msra.mxu0 %v1577
    %2009 = vmatprep.subr.bf16.mxu0 %v1584
    %2010 = vmatpush1.bf16.msra.mxu0 %v1583
    %2011 = vmatprep.subr.bf16.mxu0 %v1590
    %2012 = vmatpush1.bf16.msra.mxu0 %v1589
    %2013 = vmatprep.subr.bf16.mxu0 %v1596
    %2014 = vmatpush1.bf16.msra.mxu0 %v1595
    %2015 = vmatprep.subr.bf16.mxu0 %v1602
    %2016 = vmatpush1.bf16.msra.mxu0 %v1601
    %2017 = vmatprep.subr.bf16.mxu0 %v1608
    %2018 = vmatpush1.bf16.msra.mxu0 %v1607
    %2019 = vmatprep.subr.bf16.mxu0 %v1614
    %2020 = vmatpush1.bf16.msra.mxu0 %v1613
    %2021 = vmatprep.mubr.bf16.mxu0 %v435
    %2022 = vmatmul.mubr.bf16.gmra.mrb[0].mxu0 %v434
    %v2023 = vpop.f32.mrb[0].mxu0
    %v2024 = vadd.f32 %v1983, %v2023
    %v2025 = vpop.f32.mrb[0].mxu0
    %v2026 = vadd.f32 %v1985, %v2025
    %v2027 = vpop.f32.mrb[0].mxu0
    %v2028 = vpop.f32.mrb[0].mxu0
    %2029 = vdwg.mxu0
    %2030 = vmatprep.subr.bf16.mxu0 %v1334
    %2031 = vmatpush1.bf16.msra.mxu0 %v1333
    %2032 = vmatprep.subr.bf16.mxu0 %v1340
    %2033 = vmatpush1.bf16.msra.mxu0 %v1339
    %2034 = vmatprep.subr.bf16.mxu0 %v1346
    %2035 = vmatpush1.bf16.msra.mxu0 %v1345
    %2036 = vmatprep.subr.bf16.mxu0 %v1352
    %2037 = vmatpush1.bf16.msra.mxu0 %v1351
    %2038 = vmatprep.subr.bf16.mxu0 %v1358
    %2039 = vmatpush1.bf16.msra.mxu0 %v1357
    %2040 = vmatprep.subr.bf16.mxu0 %v1364
    %2041 = vmatpush1.bf16.msra.mxu0 %v1363
    %2042 = vmatprep.subr.bf16.mxu0 %v1370
    %2043 = vmatpush1.bf16.msra.mxu0 %v1369
    %2044 = vmatprep.subr.bf16.mxu0 %v1376
    %2045 = vmatpush1.bf16.msra.mxu0 %v1375
    %2046 = vmatprep.subr.bf16.mxu0 %v1382
    %2047 = vmatpush1.bf16.msra.mxu0 %v1381
    %2048 = vmatprep.subr.bf16.mxu0 %v1388
    %2049 = vmatpush1.bf16.msra.mxu0 %v1387
    %2050 = vmatprep.subr.bf16.mxu0 %v1394
    %2051 = vmatpush1.bf16.msra.mxu0 %v1393
    %2052 = vmatprep.subr.bf16.mxu0 %v1400
    %2053 = vmatpush1.bf16.msra.mxu0 %v1399
    %2054 = vmatprep.subr.bf16.mxu0 %v1406
    %2055 = vmatpush1.bf16.msra.mxu0 %v1405
    %2056 = vmatprep.subr.bf16.mxu0 %v1412
    %2057 = vmatpush1.bf16.msra.mxu0 %v1411
    %2058 = vmatprep.subr.bf16.mxu0 %v1418
    %2059 = vmatpush1.bf16.msra.mxu0 %v1417
    %2060 = vmatprep.subr.bf16.mxu0 %v1424
    %2061 = vmatpush1.bf16.msra.mxu0 %v1423
    %2062 = vmatprep.mubr.bf16.mxu0 %v431
    %2063 = vmatmul.mubr.bf16.gmra.mrb[0].mxu0 %v430
    %v2064 = vpop.f32.mrb[0].mxu0
    %v2065 = vadd.f32 %v448, %v2064
    %v2066 = vpop.f32.mrb[0].mxu0
    %v2067 = vadd.f32 %v452, %v2066
    %v2068 = vpop.f32.mrb[0].mxu0
    %v2069 = vpop.f32.mrb[0].mxu0
    %2070 = vdwg.mxu0
    %2071 = vmatprep.subr.bf16.mxu0 %v1430
    %2072 = vmatpush1.bf16.msra.mxu0 %v1429
    %2073 = vmatprep.subr.bf16.mxu0 %v1436
    %2074 = vmatpush1.bf16.msra.mxu0 %v1435
    %2075 = vmatprep.subr.bf16.mxu0 %v1442
    %2076 = vmatpush1.bf16.msra.mxu0 %v1441
    %2077 = vmatprep.subr.bf16.mxu0 %v1448
    %2078 = vmatpush1.bf16.msra.mxu0 %v1447
    %2079 = vmatprep.subr.bf16.mxu0 %v1454
    %2080 = vmatpush1.bf16.msra.mxu0 %v1453
    %2081 = vmatprep.subr.bf16.mxu0 %v1460
    %2082 = vmatpush1.bf16.msra.mxu0 %v1459
    %2083 = vmatprep.subr.bf16.mxu0 %v1466
    %2084 = vmatpush1.bf16.msra.mxu0 %v1465
    %2085 = vmatprep.subr.bf16.mxu0 %v1472
    %2086 = vmatpush1.bf16.msra.mxu0 %v1471
    %2087 = vmatprep.subr.bf16.mxu0 %v1478
    %2088 = vmatpush1.bf16.msra.mxu0 %v1477
    %2089 = vmatprep.subr.bf16.mxu0 %v1484
    %2090 = vmatpush1.bf16.msra.mxu0 %v1483
    %2091 = vmatprep.subr.bf16.mxu0 %v1490
    %2092 = vmatpush1.bf16.msra.mxu0 %v1489
    %2093 = vmatprep.subr.bf16.mxu0 %v1496
    %2094 = vmatpush1.bf16.msra.mxu0 %v1495
    %2095 = vmatprep.subr.bf16.mxu0 %v1502
    %2096 = vmatpush1.bf16.msra.mxu0 %v1501
    %2097 = vmatprep.subr.bf16.mxu0 %v1508
    %2098 = vmatpush1.bf16.msra.mxu0 %v1507
    %2099 = vmatprep.subr.bf16.mxu0 %v1514
    %2100 = vmatpush1.bf16.msra.mxu0 %v1513
    %2101 = vmatprep.subr.bf16.mxu0 %v1520
    %2102 = vmatpush1.bf16.msra.mxu0 %v1519
    %2103 = vmatprep.mubr.bf16.mxu0 %v433
    %2104 = vmatmul.mubr.bf16.gmra.mrb[0].mxu0 %v432
    %v2105 = vpop.f32.mrb[0].mxu0
    %v2106 = vadd.f32 %v2065, %v2105
    %v2107 = vpop.f32.mrb[0].mxu0
    %v2108 = vadd.f32 %v2067, %v2107
    %v2109 = vpop.f32.mrb[0].mxu0
    %v2110 = vpop.f32.mrb[0].mxu0
    %2111 = vdwg.mxu0
    %2112 = vmatprep.subr.bf16.mxu0 %v1526
    %2113 = vmatpush1.bf16.msra.mxu0 %v1525
    %2114 = vmatprep.subr.bf16.mxu0 %v1532
    %2115 = vmatpush1.bf16.msra.mxu0 %v1531
    %2116 = vmatprep.subr.bf16.mxu0 %v1538
    %2117 = vmatpush1.bf16.msra.mxu0 %v1537
    %2118 = vmatprep.subr.bf16.mxu0 %v1544
    %2119 = vmatpush1.bf16.msra.mxu0 %v1543
    %2120 = vmatprep.subr.bf16.mxu0 %v1550
    %2121 = vmatpush1.bf16.msra.mxu0 %v1549
    %2122 = vmatprep.subr.bf16.mxu0 %v1556
    %2123 = vmatpush1.bf16.msra.mxu0 %v1555
    %2124 = vmatprep.subr.bf16.mxu0 %v1562
    %2125 = vmatpush1.bf16.msra.mxu0 %v1561
    %2126 = vmatprep.subr.bf16.mxu0 %v1568
    %2127 = vmatpush1.bf16.msra.mxu0 %v1567
    %2128 = vmatprep.subr.bf16.mxu0 %v1574
    %2129 = vmatpush1.bf16.msra.mxu0 %v1573
    %2130 = vmatprep.subr.bf16.mxu0 %v1580
    %2131 = vmatpush1.bf16.msra.mxu0 %v1579
    %2132 = vmatprep.subr.bf16.mxu0 %v1586
    %2133 = vmatpush1.bf16.msra.mxu0 %v1585
    %2134 = vmatprep.subr.bf16.mxu0 %v1592
    %2135 = vmatpush1.bf16.msra.mxu0 %v1591
    %2136 = vmatprep.subr.bf16.mxu0 %v1598
    %2137 = vmatpush1.bf16.msra.mxu0 %v1597
    %2138 = vmatprep.subr.bf16.mxu0 %v1604
    %2139 = vmatpush1.bf16.msra.mxu0 %v1603
    %2140 = vmatprep.subr.bf16.mxu0 %v1610
    %2141 = vmatpush1.bf16.msra.mxu0 %v1609
    %2142 = vmatprep.subr.bf16.mxu0 %v1616
    %2143 = vmatpush1.bf16.msra.mxu0 %v1615
    %2144 = vmatprep.mubr.bf16.mxu0 %v435
    %2145 = vmatmul.mubr.bf16.gmra.mrb[0].mxu0 %v434
    %v2146 = vpop.f32.mrb[0].mxu0
    %v2147 = vadd.f32 %v2106, %v2146
    %v2148 = vpop.f32.mrb[0].mxu0
    %v2149 = vadd.f32 %v2108, %v2148
    %v2150 = vpop.f32.mrb[0].mxu0
    %v2151 = vpop.f32.mrb[0].mxu0
    %2152 = vdwg.mxu0
    %2153 = vmatprep.subr.bf16.mxu0 %v1336
    %2154 = vmatpush1.bf16.msra.mxu0 %v1335
    %2155 = vmatprep.subr.bf16.mxu0 %v1342
    %2156 = vmatpush1.bf16.msra.mxu0 %v1341
    %2157 = vmatprep.subr.bf16.mxu0 %v1348
    %2158 = vmatpush1.bf16.msra.mxu0 %v1347
    %2159 = vmatprep.subr.bf16.mxu0 %v1354
    %2160 = vmatpush1.bf16.msra.mxu0 %v1353
    %2161 = vmatprep.subr.bf16.mxu0 %v1360
    %2162 = vmatpush1.bf16.msra.mxu0 %v1359
    %2163 = vmatprep.subr.bf16.mxu0 %v1366
    %2164 = vmatpush1.bf16.msra.mxu0 %v1365
    %2165 = vmatprep.subr.bf16.mxu0 %v1372
    %2166 = vmatpush1.bf16.msra.mxu0 %v1371
    %2167 = vmatprep.subr.bf16.mxu0 %v1378
    %2168 = vmatpush1.bf16.msra.mxu0 %v1377
    %2169 = vmatprep.subr.bf16.mxu0 %v1384
    %2170 = vmatpush1.bf16.msra.mxu0 %v1383
    %2171 = vmatprep.subr.bf16.mxu0 %v1390
    %2172 = vmatpush1.bf16.msra.mxu0 %v1389
    %2173 = vmatprep.subr.bf16.mxu0 %v1396
    %2174 = vmatpush1.bf16.msra.mxu0 %v1395
    %2175 = vmatprep.subr.bf16.mxu0 %v1402
    %2176 = vmatpush1.bf16.msra.mxu0 %v1401
    %2177 = vmatprep.subr.bf16.mxu0 %v1408
    %2178 = vmatpush1.bf16.msra.mxu0 %v1407
    %2179 = vmatprep.subr.bf16.mxu0 %v1414
    %2180 = vmatpush1.bf16.msra.mxu0 %v1413
    %2181 = vmatprep.subr.bf16.mxu0 %v1420
    %2182 = vmatpush1.bf16.msra.mxu0 %v1419
    %2183 = vmatprep.subr.bf16.mxu0 %v1426
    %2184 = vmatpush1.bf16.msra.mxu0 %v1425
    %2185 = vmatprep.mubr.bf16.mxu0 %v431
    %2186 = vmatmul.mubr.bf16.gmra.mrb[0].mxu0 %v430
    %v2187 = vpop.f32.mrb[0].mxu0
    %v2188 = vadd.f32 %v456, %v2187
    %v2189 = vpop.f32.mrb[0].mxu0
    %v2190 = vadd.f32 %v460, %v2189
    %v2191 = vpop.f32.mrb[0].mxu0
    %v2192 = vpop.f32.mrb[0].mxu0
    %2193 = vdwg.mxu0
    %2194 = vmatprep.subr.bf16.mxu0 %v1432
    %2195 = vmatpush1.bf16.msra.mxu0 %v1431
    %2196 = vmatprep.subr.bf16.mxu0 %v1438
    %2197 = vmatpush1.bf16.msra.mxu0 %v1437
    %2198 = vmatprep.subr.bf16.mxu0 %v1444
    %2199 = vmatpush1.bf16.msra.mxu0 %v1443
    %2200 = vmatprep.subr.bf16.mxu0 %v1450
    %2201 = vmatpush1.bf16.msra.mxu0 %v1449
    %2202 = vmatprep.subr.bf16.mxu0 %v1456
    %2203 = vmatpush1.bf16.msra.mxu0 %v1455
    %2204 = vmatprep.subr.bf16.mxu0 %v1462
    %2205 = vmatpush1.bf16.msra.mxu0 %v1461
    %2206 = vmatprep.subr.bf16.mxu0 %v1468
    %2207 = vmatpush1.bf16.msra.mxu0 %v1467
    %2208 = vmatprep.subr.bf16.mxu0 %v1474
    %2209 = vmatpush1.bf16.msra.mxu0 %v1473
    %2210 = vmatprep.subr.bf16.mxu0 %v1480
    %2211 = vmatpush1.bf16.msra.mxu0 %v1479
    %2212 = vmatprep.subr.bf16.mxu0 %v1486
    %2213 = vmatpush1.bf16.msra.mxu0 %v1485
    %2214 = vmatprep.subr.bf16.mxu0 %v1492
    %2215 = vmatpush1.bf16.msra.mxu0 %v1491
    %2216 = vmatprep.subr.bf16.mxu0 %v1498
    %2217 = vmatpush1.bf16.msra.mxu0 %v1497
    %2218 = vmatprep.subr.bf16.mxu0 %v1504
    %2219 = vmatpush1.bf16.msra.mxu0 %v1503
    %2220 = vmatprep.subr.bf16.mxu0 %v1510
    %2221 = vmatpush1.bf16.msra.mxu0 %v1509
    %2222 = vmatprep.subr.bf16.mxu0 %v1516
    %2223 = vmatpush1.bf16.msra.mxu0 %v1515
    %2224 = vmatprep.subr.bf16.mxu0 %v1522
    %2225 = vmatpush1.bf16.msra.mxu0 %v1521
    %2226 = vmatprep.mubr.bf16.mxu0 %v433
    %2227 = vmatmul.mubr.bf16.gmra.mrb[0].mxu0 %v432
    %v2228 = vpop.f32.mrb[0].mxu0
    %v2229 = vadd.f32 %v2188, %v2228
    %v2230 = vpop.f32.mrb[0].mxu0
    %v2231 = vadd.f32 %v2190, %v2230
    %v2232 = vpop.f32.mrb[0].mxu0
    %v2233 = vpop.f32.mrb[0].mxu0
    %2234 = vdwg.mxu0
    %2235 = vmatprep.subr.bf16.mxu0 %v1528
    %2236 = vmatpush1.bf16.msra.mxu0 %v1527
    %2237 = vmatprep.subr.bf16.mxu0 %v1534
    %2238 = vmatpush1.bf16.msra.mxu0 %v1533
    %2239 = vmatprep.subr.bf16.mxu0 %v1540
    %2240 = vmatpush1.bf16.msra.mxu0 %v1539
    %2241 = vmatprep.subr.bf16.mxu0 %v1546
    %2242 = vmatpush1.bf16.msra.mxu0 %v1545
    %2243 = vmatprep.subr.bf16.mxu0 %v1552
    %2244 = vmatpush1.bf16.msra.mxu0 %v1551
    %2245 = vmatprep.subr.bf16.mxu0 %v1558
    %2246 = vmatpush1.bf16.msra.mxu0 %v1557
    %2247 = vmatprep.subr.bf16.mxu0 %v1564
    %2248 = vmatpush1.bf16.msra.mxu0 %v1563
    %2249 = vmatprep.subr.bf16.mxu0 %v1570
    %2250 = vmatpush1.bf16.msra.mxu0 %v1569
    %2251 = vmatprep.subr.bf16.mxu0 %v1576
    %2252 = vmatpush1.bf16.msra.mxu0 %v1575
    %2253 = vmatprep.subr.bf16.mxu0 %v1582
    %2254 = vmatpush1.bf16.msra.mxu0 %v1581
    %2255 = vmatprep.subr.bf16.mxu0 %v1588
    %2256 = vmatpush1.bf16.msra.mxu0 %v1587
    %2257 = vmatprep.subr.bf16.mxu0 %v1594
    %2258 = vmatpush1.bf16.msra.mxu0 %v1593
    %2259 = vmatprep.subr.bf16.mxu0 %v1600
    %2260 = vmatpush1.bf16.msra.mxu0 %v1599
    %2261 = vmatprep.subr.bf16.mxu0 %v1606
    %2262 = vmatpush1.bf16.msra.mxu0 %v1605
    %2263 = vmatprep.subr.bf16.mxu0 %v1612
    %2264 = vmatpush1.bf16.msra.mxu0 %v1611
    %2265 = vmatprep.subr.bf16.mxu0 %v1618
    %2266 = vmatpush1.bf16.msra.mxu0 %v1617
    %2267 = vmatprep.mubr.bf16.mxu0 %v435
    %2268 = vmatmul.mubr.bf16.gmra.mrb[0].mxu0 %v434
    %v2269 = vpop.f32.mrb[0].mxu0
    %v2270 = vadd.f32 %v2229, %v2269
    %v2271 = vpop.f32.mrb[0].mxu0
    %v2272 = vadd.f32 %v2231, %v2271
    %v2273 = vpop.f32.mrb[0].mxu0
    %v2274 = vpop.f32.mrb[0].mxu0
    %2275 = vdwg.mxu0
    %v2276 = vpack.c.bf16 %v2024, %v2024
    %v2277 = vpack.c.bf16 %v2026, %v2026
    %v2278 = vpack.c.bf16 %v2147, %v2147
    %v2279 = vpack.c.bf16 %v2149, %v2149
    %v2280 = vpack.c.bf16 %v2270, %v2270
    %v2281 = vpack.c.bf16 %v2272, %v2272
    %2282 = vmatprep.subr.bf16.mxu0 %v1332
    %2283 = vmatpush1.bf16.msra.mxu0 %v1331
    %2284 = vmatprep.subr.bf16.mxu0 %v1338
    %2285 = vmatpush1.bf16.msra.mxu0 %v1337
    %2286 = vmatprep.subr.bf16.mxu0 %v1344
    %2287 = vmatpush1.bf16.msra.mxu0 %v1343
    %2288 = vmatprep.subr.bf16.mxu0 %v1350
    %2289 = vmatpush1.bf16.msra.mxu0 %v1349
    %2290 = vmatprep.subr.bf16.mxu0 %v1356
    %2291 = vmatpush1.bf16.msra.mxu0 %v1355
    %2292 = vmatprep.subr.bf16.mxu0 %v1362
    %2293 = vmatpush1.bf16.msra.mxu0 %v1361
    %2294 = vmatprep.subr.bf16.mxu0 %v1368
    %2295 = vmatpush1.bf16.msra.mxu0 %v1367
    %2296 = vmatprep.subr.bf16.mxu0 %v1374
    %2297 = vmatpush1.bf16.msra.mxu0 %v1373
    %2298 = vmatprep.subr.bf16.mxu0 %v1380
    %2299 = vmatpush1.bf16.msra.mxu0 %v1379
    %2300 = vmatprep.subr.bf16.mxu0 %v1386
    %2301 = vmatpush1.bf16.msra.mxu0 %v1385
    %2302 = vmatprep.subr.bf16.mxu0 %v1392
    %2303 = vmatpush1.bf16.msra.mxu0 %v1391
    %2304 = vmatprep.subr.bf16.mxu0 %v1398
    %2305 = vmatpush1.bf16.msra.mxu0 %v1397
    %2306 = vmatprep.subr.bf16.mxu0 %v1404
    %2307 = vmatpush1.bf16.msra.mxu0 %v1403
    %2308 = vmatprep.subr.bf16.mxu0 %v1410
    %2309 = vmatpush1.bf16.msra.mxu0 %v1409
    %2310 = vmatprep.subr.bf16.mxu0 %v1416
    %2311 = vmatpush1.bf16.msra.mxu0 %v1415
    %2312 = vmatprep.subr.bf16.mxu0 %v1422
    %2313 = vmatpush1.bf16.msra.mxu0 %v1421
    %2314 = vmatprep.mubr.bf16.mxu0 %v2277
    %2315 = vmatmul.mubr.bf16.gmra.mrb[0].mxu0 %v2276
    %v2316 = vpop.f32.mrb[0].mxu0
    %v2317 = vadd.f32 %v440, %v2316
    %v2318 = vpop.f32.mrb[0].mxu0
    %v2319 = vadd.f32 %v444, %v2318
    %v2320 = vpop.f32.mrb[0].mxu0
    %v2321 = vpop.f32.mrb[0].mxu0
    %2322 = vdwg.mxu0
    %2323 = vmatprep.subr.bf16.mxu0 %v1428
    %2324 = vmatpush1.bf16.msra.mxu0 %v1427
    %2325 = vmatprep.subr.bf16.mxu0 %v1434
    %2326 = vmatpush1.bf16.msra.mxu0 %v1433
    %2327 = vmatprep.subr.bf16.mxu0 %v1440
    %2328 = vmatpush1.bf16.msra.mxu0 %v1439
    %2329 = vmatprep.subr.bf16.mxu0 %v1446
    %2330 = vmatpush1.bf16.msra.mxu0 %v1445
    %2331 = vmatprep.subr.bf16.mxu0 %v1452
    %2332 = vmatpush1.bf16.msra.mxu0 %v1451
    %2333 = vmatprep.subr.bf16.mxu0 %v1458
    %2334 = vmatpush1.bf16.msra.mxu0 %v1457
    %2335 = vmatprep.subr.bf16.mxu0 %v1464
    %2336 = vmatpush1.bf16.msra.mxu0 %v1463
    %2337 = vmatprep.subr.bf16.mxu0 %v1470
    %2338 = vmatpush1.bf16.msra.mxu0 %v1469
    %2339 = vmatprep.subr.bf16.mxu0 %v1476
    %2340 = vmatpush1.bf16.msra.mxu0 %v1475
    %2341 = vmatprep.subr.bf16.mxu0 %v1482
    %2342 = vmatpush1.bf16.msra.mxu0 %v1481
    %2343 = vmatprep.subr.bf16.mxu0 %v1488
    %2344 = vmatpush1.bf16.msra.mxu0 %v1487
    %2345 = vmatprep.subr.bf16.mxu0 %v1494
    %2346 = vmatpush1.bf16.msra.mxu0 %v1493
    %2347 = vmatprep.subr.bf16.mxu0 %v1500
    %2348 = vmatpush1.bf16.msra.mxu0 %v1499
    %2349 = vmatprep.subr.bf16.mxu0 %v1506
    %2350 = vmatpush1.bf16.msra.mxu0 %v1505
    %2351 = vmatprep.subr.bf16.mxu0 %v1512
    %2352 = vmatpush1.bf16.msra.mxu0 %v1511
    %2353 = vmatprep.subr.bf16.mxu0 %v1518
    %2354 = vmatpush1.bf16.msra.mxu0 %v1517
    %2355 = vmatprep.mubr.bf16.mxu0 %v2279
    %2356 = vmatmul.mubr.bf16.gmra.mrb[0].mxu0 %v2278
    %v2357 = vpop.f32.mrb[0].mxu0
    %v2358 = vadd.f32 %v2317, %v2357
    %v2359 = vpop.f32.mrb[0].mxu0
    %v2360 = vadd.f32 %v2319, %v2359
    %v2361 = vpop.f32.mrb[0].mxu0
    %v2362 = vpop.f32.mrb[0].mxu0
    %2363 = vdwg.mxu0
    %2364 = vmatprep.subr.bf16.mxu0 %v1524
    %2365 = vmatpush1.bf16.msra.mxu0 %v1523
    %2366 = vmatprep.subr.bf16.mxu0 %v1530
    %2367 = vmatpush1.bf16.msra.mxu0 %v1529
    %2368 = vmatprep.subr.bf16.mxu0 %v1536
    %2369 = vmatpush1.bf16.msra.mxu0 %v1535
    %2370 = vmatprep.subr.bf16.mxu0 %v1542
    %2371 = vmatpush1.bf16.msra.mxu0 %v1541
    %2372 = vmatprep.subr.bf16.mxu0 %v1548
    %2373 = vmatpush1.bf16.msra.mxu0 %v1547
    %2374 = vmatprep.subr.bf16.mxu0 %v1554
    %2375 = vmatpush1.bf16.msra.mxu0 %v1553
    %2376 = vmatprep.subr.bf16.mxu0 %v1560
    %2377 = vmatpush1.bf16.msra.mxu0 %v1559
    %2378 = vmatprep.subr.bf16.mxu0 %v1566
    %2379 = vmatpush1.bf16.msra.mxu0 %v1565
    %2380 = vmatprep.subr.bf16.mxu0 %v1572
    %2381 = vmatpush1.bf16.msra.mxu0 %v1571
    %2382 = vmatprep.subr.bf16.mxu0 %v1578
    %2383 = vmatpush1.bf16.msra.mxu0 %v1577
    %2384 = vmatprep.subr.bf16.mxu0 %v1584
    %2385 = vmatpush1.bf16.msra.mxu0 %v1583
    %2386 = vmatprep.subr.bf16.mxu0 %v1590
    %2387 = vmatpush1.bf16.msra.mxu0 %v1589
    %2388 = vmatprep.subr.bf16.mxu0 %v1596
    %2389 = vmatpush1.bf16.msra.mxu0 %v1595
    %2390 = vmatprep.subr.bf16.mxu0 %v1602
    %2391 = vmatpush1.bf16.msra.mxu0 %v1601
    %2392 = vmatprep.subr.bf16.mxu0 %v1608
    %2393 = vmatpush1.bf16.msra.mxu0 %v1607
    %2394 = vmatprep.subr.bf16.mxu0 %v1614
    %2395 = vmatpush1.bf16.msra.mxu0 %v1613
    %2396 = vmatprep.mubr.bf16.mxu0 %v2281
    %2397 = vmatmul.mubr.bf16.gmra.mrb[0].mxu0 %v2280
    %v2398 = vpop.f32.mrb[0].mxu0
    %v2399 = vadd.f32 %v2358, %v2398
    %v2400 = vpop.f32.mrb[0].mxu0
    %v2401 = vadd.f32 %v2360, %v2400
    %v2402 = vpop.f32.mrb[0].mxu0
    %v2403 = vpop.f32.mrb[0].mxu0
    %2404 = vdwg.mxu0
    %2405 = vmatprep.subr.bf16.mxu0 %v1334
    %2406 = vmatpush1.bf16.msra.mxu0 %v1333
    %2407 = vmatprep.subr.bf16.mxu0 %v1340
    %2408 = vmatpush1.bf16.msra.mxu0 %v1339
    %2409 = vmatprep.subr.bf16.mxu0 %v1346
    %2410 = vmatpush1.bf16.msra.mxu0 %v1345
    %2411 = vmatprep.subr.bf16.mxu0 %v1352
    %2412 = vmatpush1.bf16.msra.mxu0 %v1351
    %2413 = vmatprep.subr.bf16.mxu0 %v1358
    %2414 = vmatpush1.bf16.msra.mxu0 %v1357
    %2415 = vmatprep.subr.bf16.mxu0 %v1364
    %2416 = vmatpush1.bf16.msra.mxu0 %v1363
    %2417 = vmatprep.subr.bf16.mxu0 %v1370
    %2418 = vmatpush1.bf16.msra.mxu0 %v1369
    %2419 = vmatprep.subr.bf16.mxu0 %v1376
    %2420 = vmatpush1.bf16.msra.mxu0 %v1375
    %2421 = vmatprep.subr.bf16.mxu0 %v1382
    %2422 = vmatpush1.bf16.msra.mxu0 %v1381
    %2423 = vmatprep.subr.bf16.mxu0 %v1388
    %2424 = vmatpush1.bf16.msra.mxu0 %v1387
    %2425 = vmatprep.subr.bf16.mxu0 %v1394
    %2426 = vmatpush1.bf16.msra.mxu0 %v1393
    %2427 = vmatprep.subr.bf16.mxu0 %v1400
    %2428 = vmatpush1.bf16.msra.mxu0 %v1399
    %2429 = vmatprep.subr.bf16.mxu0 %v1406
    %2430 = vmatpush1.bf16.msra.mxu0 %v1405
    %2431 = vmatprep.subr.bf16.mxu0 %v1412
    %2432 = vmatpush1.bf16.msra.mxu0 %v1411
    %2433 = vmatprep.subr.bf16.mxu0 %v1418
    %2434 = vmatpush1.bf16.msra.mxu0 %v1417
    %2435 = vmatprep.subr.bf16.mxu0 %v1424
    %2436 = vmatpush1.bf16.msra.mxu0 %v1423
    %2437 = vmatprep.mubr.bf16.mxu0 %v2277
    %2438 = vmatmul.mubr.bf16.gmra.mrb[0].mxu0 %v2276
    %v2439 = vpop.f32.mrb[0].mxu0
    %v2440 = vadd.f32 %v448, %v2439
    %v2441 = vpop.f32.mrb[0].mxu0
    %v2442 = vadd.f32 %v452, %v2441
    %v2443 = vpop.f32.mrb[0].mxu0
    %v2444 = vpop.f32.mrb[0].mxu0
    %2445 = vdwg.mxu0
    %2446 = vmatprep.subr.bf16.mxu0 %v1430
    %2447 = vmatpush1.bf16.msra.mxu0 %v1429
    %2448 = vmatprep.subr.bf16.mxu0 %v1436
    %2449 = vmatpush1.bf16.msra.mxu0 %v1435
    %2450 = vmatprep.subr.bf16.mxu0 %v1442
    %2451 = vmatpush1.bf16.msra.mxu0 %v1441
    %2452 = vmatprep.subr.bf16.mxu0 %v1448
    %2453 = vmatpush1.bf16.msra.mxu0 %v1447
    %2454 = vmatprep.subr.bf16.mxu0 %v1454
    %2455 = vmatpush1.bf16.msra.mxu0 %v1453
    %2456 = vmatprep.subr.bf16.mxu0 %v1460
    %2457 = vmatpush1.bf16.msra.mxu0 %v1459
    %2458 = vmatprep.subr.bf16.mxu0 %v1466
    %2459 = vmatpush1.bf16.msra.mxu0 %v1465
    %2460 = vmatprep.subr.bf16.mxu0 %v1472
    %2461 = vmatpush1.bf16.msra.mxu0 %v1471
    %2462 = vmatprep.subr.bf16.mxu0 %v1478
    %2463 = vmatpush1.bf16.msra.mxu0 %v1477
    %2464 = vmatprep.subr.bf16.mxu0 %v1484
    %2465 = vmatpush1.bf16.msra.mxu0 %v1483
    %2466 = vmatprep.subr.bf16.mxu0 %v1490
    %2467 = vmatpush1.bf16.msra.mxu0 %v1489
    %2468 = vmatprep.subr.bf16.mxu0 %v1496
    %2469 = vmatpush1.bf16.msra.mxu0 %v1495
    %2470 = vmatprep.subr.bf16.mxu0 %v1502
    %2471 = vmatpush1.bf16.msra.mxu0 %v1501
    %2472 = vmatprep.subr.bf16.mxu0 %v1508
    %2473 = vmatpush1.bf16.msra.mxu0 %v1507
    %2474 = vmatprep.subr.bf16.mxu0 %v1514
    %2475 = vmatpush1.bf16.msra.mxu0 %v1513
    %2476 = vmatprep.subr.bf16.mxu0 %v1520
    %2477 = vmatpush1.bf16.msra.mxu0 %v1519
    %2478 = vmatprep.mubr.bf16.mxu0 %v2279
    %2479 = vmatmul.mubr.bf16.gmra.mrb[0].mxu0 %v2278
    %v2480 = vpop.f32.mrb[0].mxu0
    %v2481 = vadd.f32 %v2440, %v2480
    %v2482 = vpop.f32.mrb[0].mxu0
    %v2483 = vadd.f32 %v2442, %v2482
    %v2484 = vpop.f32.mrb[0].mxu0
    %v2485 = vpop.f32.mrb[0].mxu0
    %2486 = vdwg.mxu0
    %2487 = vmatprep.subr.bf16.mxu0 %v1526
    %2488 = vmatpush1.bf16.msra.mxu0 %v1525
    %2489 = vmatprep.subr.bf16.mxu0 %v1532
    %2490 = vmatpush1.bf16.msra.mxu0 %v1531
    %2491 = vmatprep.subr.bf16.mxu0 %v1538
    %2492 = vmatpush1.bf16.msra.mxu0 %v1537
    %2493 = vmatprep.subr.bf16.mxu0 %v1544
    %2494 = vmatpush1.bf16.msra.mxu0 %v1543
    %2495 = vmatprep.subr.bf16.mxu0 %v1550
    %2496 = vmatpush1.bf16.msra.mxu0 %v1549
    %2497 = vmatprep.subr.bf16.mxu0 %v1556
    %2498 = vmatpush1.bf16.msra.mxu0 %v1555
    %2499 = vmatprep.subr.bf16.mxu0 %v1562
    %2500 = vmatpush1.bf16.msra.mxu0 %v1561
    %2501 = vmatprep.subr.bf16.mxu0 %v1568
    %2502 = vmatpush1.bf16.msra.mxu0 %v1567
    %2503 = vmatprep.subr.bf16.mxu0 %v1574
    %2504 = vmatpush1.bf16.msra.mxu0 %v1573
    %2505 = vmatprep.subr.bf16.mxu0 %v1580
    %2506 = vmatpush1.bf16.msra.mxu0 %v1579
    %2507 = vmatprep.subr.bf16.mxu0 %v1586
    %2508 = vmatpush1.bf16.msra.mxu0 %v1585
    %2509 = vmatprep.subr.bf16.mxu0 %v1592
    %2510 = vmatpush1.bf16.msra.mxu0 %v1591
    %2511 = vmatprep.subr.bf16.mxu0 %v1598
    %2512 = vmatpush1.bf16.msra.mxu0 %v1597
    %2513 = vmatprep.subr.bf16.mxu0 %v1604
    %2514 = vmatpush1.bf16.msra.mxu0 %v1603
    %2515 = vmatprep.subr.bf16.mxu0 %v1610
    %2516 = vmatpush1.bf16.msra.mxu0 %v1609
    %2517 = vmatprep.subr.bf16.mxu0 %v1616
    %2518 = vmatpush1.bf16.msra.mxu0 %v1615
    %2519 = vmatprep.mubr.bf16.mxu0 %v2281
    %2520 = vmatmul.mubr.bf16.gmra.mrb[0].mxu0 %v2280
    %v2521 = vpop.f32.mrb[0].mxu0
    %v2522 = vadd.f32 %v2481, %v2521
    %v2523 = vpop.f32.mrb[0].mxu0
    %v2524 = vadd.f32 %v2483, %v2523
    %v2525 = vpop.f32.mrb[0].mxu0
    %v2526 = vpop.f32.mrb[0].mxu0
    %2527 = vdwg.mxu0
    %2528 = vmatprep.subr.bf16.mxu0 %v1336
    %2529 = vmatpush1.bf16.msra.mxu0 %v1335
    %2530 = vmatprep.subr.bf16.mxu0 %v1342
    %2531 = vmatpush1.bf16.msra.mxu0 %v1341
    %2532 = vmatprep.subr.bf16.mxu0 %v1348
    %2533 = vmatpush1.bf16.msra.mxu0 %v1347
    %2534 = vmatprep.subr.bf16.mxu0 %v1354
    %2535 = vmatpush1.bf16.msra.mxu0 %v1353
    %2536 = vmatprep.subr.bf16.mxu0 %v1360
    %2537 = vmatpush1.bf16.msra.mxu0 %v1359
    %2538 = vmatprep.subr.bf16.mxu0 %v1366
    %2539 = vmatpush1.bf16.msra.mxu0 %v1365
    %2540 = vmatprep.subr.bf16.mxu0 %v1372
    %2541 = vmatpush1.bf16.msra.mxu0 %v1371
    %2542 = vmatprep.subr.bf16.mxu0 %v1378
    %2543 = vmatpush1.bf16.msra.mxu0 %v1377
    %2544 = vmatprep.subr.bf16.mxu0 %v1384
    %2545 = vmatpush1.bf16.msra.mxu0 %v1383
    %2546 = vmatprep.subr.bf16.mxu0 %v1390
    %2547 = vmatpush1.bf16.msra.mxu0 %v1389
    %2548 = vmatprep.subr.bf16.mxu0 %v1396
    %2549 = vmatpush1.bf16.msra.mxu0 %v1395
    %2550 = vmatprep.subr.bf16.mxu0 %v1402
    %2551 = vmatpush1.bf16.msra.mxu0 %v1401
    %2552 = vmatprep.subr.bf16.mxu0 %v1408
    %2553 = vmatpush1.bf16.msra.mxu0 %v1407
    %2554 = vmatprep.subr.bf16.mxu0 %v1414
    %2555 = vmatpush1.bf16.msra.mxu0 %v1413
    %2556 = vmatprep.subr.bf16.mxu0 %v1420
    %2557 = vmatpush1.bf16.msra.mxu0 %v1419
    %2558 = vmatprep.subr.bf16.mxu0 %v1426
    %2559 = vmatpush1.bf16.msra.mxu0 %v1425
    %2560 = vmatprep.mubr.bf16.mxu0 %v2277
    %2561 = vmatmul.mubr.bf16.gmra.mrb[0].mxu0 %v2276
    %v2562 = vpop.f32.mrb[0].mxu0
    %v2563 = vadd.f32 %v456, %v2562
    %v2564 = vpop.f32.mrb[0].mxu0
    %v2565 = vadd.f32 %v460, %v2564
    %v2566 = vpop.f32.mrb[0].mxu0
    %v2567 = vpop.f32.mrb[0].mxu0
    %2568 = vdwg.mxu0
    %2569 = vmatprep.subr.bf16.mxu0 %v1432
    %2570 = vmatpush1.bf16.msra.mxu0 %v1431
    %2571 = vmatprep.subr.bf16.mxu0 %v1438
    %2572 = vmatpush1.bf16.msra.mxu0 %v1437
    %2573 = vmatprep.subr.bf16.mxu0 %v1444
    %2574 = vmatpush1.bf16.msra.mxu0 %v1443
    %2575 = vmatprep.subr.bf16.mxu0 %v1450
    %2576 = vmatpush1.bf16.msra.mxu0 %v1449
    %2577 = vmatprep.subr.bf16.mxu0 %v1456
    %2578 = vmatpush1.bf16.msra.mxu0 %v1455
    %2579 = vmatprep.subr.bf16.mxu0 %v1462
    %2580 = vmatpush1.bf16.msra.mxu0 %v1461
    %2581 = vmatprep.subr.bf16.mxu0 %v1468
    %2582 = vmatpush1.bf16.msra.mxu0 %v1467
    %2583 = vmatprep.subr.bf16.mxu0 %v1474
    %2584 = vmatpush1.bf16.msra.mxu0 %v1473
    %2585 = vmatprep.subr.bf16.mxu0 %v1480
    %2586 = vmatpush1.bf16.msra.mxu0 %v1479
    %2587 = vmatprep.subr.bf16.mxu0 %v1486
    %2588 = vmatpush1.bf16.msra.mxu0 %v1485
    %2589 = vmatprep.subr.bf16.mxu0 %v1492
    %2590 = vmatpush1.bf16.msra.mxu0 %v1491
    %2591 = vmatprep.subr.bf16.mxu0 %v1498
    %2592 = vmatpush1.bf16.msra.mxu0 %v1497
    %2593 = vmatprep.subr.bf16.mxu0 %v1504
    %2594 = vmatpush1.bf16.msra.mxu0 %v1503
    %2595 = vmatprep.subr.bf16.mxu0 %v1510
    %2596 = vmatpush1.bf16.msra.mxu0 %v1509
    %2597 = vmatprep.subr.bf16.mxu0 %v1516
    %2598 = vmatpush1.bf16.msra.mxu0 %v1515
    %2599 = vmatprep.subr.bf16.mxu0 %v1522
    %2600 = vmatpush1.bf16.msra.mxu0 %v1521
    %2601 = vmatprep.mubr.bf16.mxu0 %v2279
    %2602 = vmatmul.mubr.bf16.gmra.mrb[0].mxu0 %v2278
    %v2603 = vpop.f32.mrb[0].mxu0
    %v2604 = vadd.f32 %v2563, %v2603
    %v2605 = vpop.f32.mrb[0].mxu0
    %v2606 = vadd.f32 %v2565, %v2605
    %v2607 = vpop.f32.mrb[0].mxu0
    %v2608 = vpop.f32.mrb[0].mxu0
    %2609 = vdwg.mxu0
    %2610 = vmatprep.subr.bf16.mxu0 %v1528
    %2611 = vmatpush1.bf16.msra.mxu0 %v1527
    %2612 = vmatprep.subr.bf16.mxu0 %v1534
    %2613 = vmatpush1.bf16.msra.mxu0 %v1533
    %2614 = vmatprep.subr.bf16.mxu0 %v1540
    %2615 = vmatpush1.bf16.msra.mxu0 %v1539
    %2616 = vmatprep.subr.bf16.mxu0 %v1546
    %2617 = vmatpush1.bf16.msra.mxu0 %v1545
    %2618 = vmatprep.subr.bf16.mxu0 %v1552
    %2619 = vmatpush1.bf16.msra.mxu0 %v1551
    %2620 = vmatprep.subr.bf16.mxu0 %v1558
    %2621 = vmatpush1.bf16.msra.mxu0 %v1557
    %2622 = vmatprep.subr.bf16.mxu0 %v1564
    %2623 = vmatpush1.bf16.msra.mxu0 %v1563
    %2624 = vmatprep.subr.bf16.mxu0 %v1570
    %2625 = vmatpush1.bf16.msra.mxu0 %v1569
    %2626 = vmatprep.subr.bf16.mxu0 %v1576
    %2627 = vmatpush1.bf16.msra.mxu0 %v1575
    %2628 = vmatprep.subr.bf16.mxu0 %v1582
    %2629 = vmatpush1.bf16.msra.mxu0 %v1581
    %2630 = vmatprep.subr.bf16.mxu0 %v1588
    %2631 = vmatpush1.bf16.msra.mxu0 %v1587
    %2632 = vmatprep.subr.bf16.mxu0 %v1594
    %2633 = vmatpush1.bf16.msra.mxu0 %v1593
    %2634 = vmatprep.subr.bf16.mxu0 %v1600
    %2635 = vmatpush1.bf16.msra.mxu0 %v1599
    %2636 = vmatprep.subr.bf16.mxu0 %v1606
    %2637 = vmatpush1.bf16.msra.mxu0 %v1605
    %2638 = vmatprep.subr.bf16.mxu0 %v1612
    %2639 = vmatpush1.bf16.msra.mxu0 %v1611
    %2640 = vmatprep.subr.bf16.mxu0 %v1618
    %2641 = vmatpush1.bf16.msra.mxu0 %v1617
    %2642 = vmatprep.mubr.bf16.mxu0 %v2281
    %2643 = vmatmul.mubr.bf16.gmra.mrb[0].mxu0 %v2280
    %v2644 = vpop.f32.mrb[0].mxu0
    %v2645 = vadd.f32 %v2604, %v2644
    %v2646 = vpop.f32.mrb[0].mxu0
    %v2647 = vadd.f32 %v2606, %v2646
    %v2648 = vpop.f32.mrb[0].mxu0
    %v2649 = vpop.f32.mrb[0].mxu0
    %2650 = vdwg.mxu0
    %2651 = vst [vmem:[#allocation13] sm:$0xff] %v2399
    %2652 = vst [vmem:[#allocation13 + $0x8] sm:$0xff] %v2401
    %2653 = vst [vmem:[#allocation13 + $0x10] sm:$0xff] %v2522
    %2654 = vst [vmem:[#allocation13 + $0x18] sm:$0xff] %v2524
    %2655 = vst [vmem:[#allocation13 + $0x20] sm:$0xff] %v2645
    %2656 = vst [vmem:[#allocation13 + $0x28] sm:$0xff] %v2647
    %v2657 = vpack.c.bf16 %v102, %v102
    %v2658 = vpack.c.bf16 %v103, %v103
    %v2659 = vpack.c.bf16 %v104, %v104
    %v2660 = vpack.c.bf16 %v105, %v105
    %v2661 = vpack.c.bf16 %v106, %v106
    %v2662 = vpack.c.bf16 %v107, %v107
    %v2663 = vld [vmem:[#allocation10] sm:$0xf]
    %v2664 = vld [vmem:[#allocation10 + $0x4] sm:$0xf]
    %v2665 = vld [vmem:[#allocation10 + $0x8] sm:$0xf]
    %v2666 = vld [vmem:[#allocation10 + $0xc] sm:$0xf]
    %v2667 = vld [vmem:[#allocation10 + $0x10] sm:$0xf]
    %v2668 = vld [vmem:[#allocation10 + $0x14] sm:$0xf]
    %v2669 = vld [vmem:[#allocation10 + $0x18] sm:$0xf]
    %v2670 = vld [vmem:[#allocation10 + $0x1c] sm:$0xf]
    %v2671 = vld [vmem:[#allocation10 + $0x20] sm:$0xf]
    %v2672 = vld [vmem:[#allocation10 + $0x24] sm:$0xf]
    %v2673 = vld [vmem:[#allocation10 + $0x28] sm:$0xf]
    %v2674 = vld [vmem:[#allocation10 + $0x2c] sm:$0xf]
    %v2675 = vld [vmem:[#allocation10 + $0x30] sm:$0xf]
    %v2676 = vld [vmem:[#allocation10 + $0x34] sm:$0xf]
    %v2677 = vld [vmem:[#allocation10 + $0x38] sm:$0xf]
    %v2678 = vld [vmem:[#allocation10 + $0x3c] sm:$0xf]
    %v2679 = vld [vmem:[#allocation10 + $0x40] sm:$0xf]
    %v2680 = vld [vmem:[#allocation10 + $0x44] sm:$0xf]
    %v2681 = vld [vmem:[#allocation10 + $0x48] sm:$0xf]
    %v2682 = vld [vmem:[#allocation10 + $0x4c] sm:$0xf]
    %v2683 = vld [vmem:[#allocation10 + $0x50] sm:$0xf]
    %v2684 = vld [vmem:[#allocation10 + $0x54] sm:$0xf]
    %v2685 = vld [vmem:[#allocation10 + $0x58] sm:$0xf]
    %v2686 = vld [vmem:[#allocation10 + $0x5c] sm:$0xf]
    %v2687 = vld [vmem:[#allocation10 + $0x60] sm:$0xf]
    %v2688 = vld [vmem:[#allocation10 + $0x64] sm:$0xf]
    %v2689 = vld [vmem:[#allocation10 + $0x68] sm:$0xf]
    %v2690 = vld [vmem:[#allocation10 + $0x6c] sm:$0xf]
    %v2691 = vld [vmem:[#allocation10 + $0x70] sm:$0xf]
    %v2692 = vld [vmem:[#allocation10 + $0x74] sm:$0xf]
    %v2693 = vld [vmem:[#allocation10 + $0x78] sm:$0xf]
    %v2694 = vld [vmem:[#allocation10 + $0x7c] sm:$0xf]
    %v2695 = vld [vmem:[#allocation10 + $0x80] sm:$0xf]
    %v2696 = vld [vmem:[#allocation10 + $0x84] sm:$0xf]
    %v2697 = vld [vmem:[#allocation10 + $0x88] sm:$0xf]
    %v2698 = vld [vmem:[#allocation10 + $0x8c] sm:$0xf]
    %v2699 = vld [vmem:[#allocation10 + $0x90] sm:$0xf]
    %v2700 = vld [vmem:[#allocation10 + $0x94] sm:$0xf]
    %v2701 = vld [vmem:[#allocation10 + $0x98] sm:$0xf]
    %v2702 = vld [vmem:[#allocation10 + $0x9c] sm:$0xf]
    %v2703 = vld [vmem:[#allocation10 + $0xa0] sm:$0xf]
    %v2704 = vld [vmem:[#allocation10 + $0xa4] sm:$0xf]
    %v2705 = vld [vmem:[#allocation10 + $0xa8] sm:$0xf]
    %v2706 = vld [vmem:[#allocation10 + $0xac] sm:$0xf]
    %v2707 = vld [vmem:[#allocation10 + $0xb0] sm:$0xf]
    %v2708 = vld [vmem:[#allocation10 + $0xb4] sm:$0xf]
    %v2709 = vld [vmem:[#allocation10 + $0xb8] sm:$0xf]
    %v2710 = vld [vmem:[#allocation10 + $0xbc] sm:$0xf]
    %v2711 = vld [vmem:[#allocation10 + $0xc0] sm:$0xf]
    %v2712 = vld [vmem:[#allocation10 + $0xc4] sm:$0xf]
    %v2713 = vld [vmem:[#allocation10 + $0xc8] sm:$0xf]
    %v2714 = vld [vmem:[#allocation10 + $0xcc] sm:$0xf]
    %v2715 = vld [vmem:[#allocation10 + $0xd0] sm:$0xf]
    %v2716 = vld [vmem:[#allocation10 + $0xd4] sm:$0xf]
    %v2717 = vld [vmem:[#allocation10 + $0xd8] sm:$0xf]
    %v2718 = vld [vmem:[#allocation10 + $0xdc] sm:$0xf]
    %v2719 = vld [vmem:[#allocation10 + $0xe0] sm:$0xf]
    %v2720 = vld [vmem:[#allocation10 + $0xe4] sm:$0xf]
    %v2721 = vld [vmem:[#allocation10 + $0xe8] sm:$0xf]
    %v2722 = vld [vmem:[#allocation10 + $0xec] sm:$0xf]
    %v2723 = vld [vmem:[#allocation10 + $0xf0] sm:$0xf]
    %v2724 = vld [vmem:[#allocation10 + $0xf4] sm:$0xf]
    %v2725 = vld [vmem:[#allocation10 + $0xf8] sm:$0xf]
    %v2726 = vld [vmem:[#allocation10 + $0xfc] sm:$0xf]
    %v2727 = vld [vmem:[#allocation10 + $0x100] sm:$0xf]
    %v2728 = vld [vmem:[#allocation10 + $0x104] sm:$0xf]
    %v2729 = vld [vmem:[#allocation10 + $0x108] sm:$0xf]
    %v2730 = vld [vmem:[#allocation10 + $0x10c] sm:$0xf]
    %v2731 = vld [vmem:[#allocation10 + $0x110] sm:$0xf]
    %v2732 = vld [vmem:[#allocation10 + $0x114] sm:$0xf]
    %v2733 = vld [vmem:[#allocation10 + $0x118] sm:$0xf]
    %v2734 = vld [vmem:[#allocation10 + $0x11c] sm:$0xf]
    %v2735 = vld [vmem:[#allocation10 + $0x120] sm:$0xf]
    %v2736 = vld [vmem:[#allocation10 + $0x124] sm:$0xf]
    %v2737 = vld [vmem:[#allocation10 + $0x128] sm:$0xf]
    %v2738 = vld [vmem:[#allocation10 + $0x12c] sm:$0xf]
    %v2739 = vld [vmem:[#allocation10 + $0x130] sm:$0xf]
    %v2740 = vld [vmem:[#allocation10 + $0x134] sm:$0xf]
    %v2741 = vld [vmem:[#allocation10 + $0x138] sm:$0xf]
    %v2742 = vld [vmem:[#allocation10 + $0x13c] sm:$0xf]
    %v2743 = vld [vmem:[#allocation10 + $0x140] sm:$0xf]
    %v2744 = vld [vmem:[#allocation10 + $0x144] sm:$0xf]
    %v2745 = vld [vmem:[#allocation10 + $0x148] sm:$0xf]
    %v2746 = vld [vmem:[#allocation10 + $0x14c] sm:$0xf]
    %v2747 = vld [vmem:[#allocation10 + $0x150] sm:$0xf]
    %v2748 = vld [vmem:[#allocation10 + $0x154] sm:$0xf]
    %v2749 = vld [vmem:[#allocation10 + $0x158] sm:$0xf]
    %v2750 = vld [vmem:[#allocation10 + $0x15c] sm:$0xf]
    %v2751 = vld [vmem:[#allocation10 + $0x160] sm:$0xf]
    %v2752 = vld [vmem:[#allocation10 + $0x164] sm:$0xf]
    %v2753 = vld [vmem:[#allocation10 + $0x168] sm:$0xf]
    %v2754 = vld [vmem:[#allocation10 + $0x16c] sm:$0xf]
    %v2755 = vld [vmem:[#allocation10 + $0x170] sm:$0xf]
    %v2756 = vld [vmem:[#allocation10 + $0x174] sm:$0xf]
    %v2757 = vld [vmem:[#allocation10 + $0x178] sm:$0xf]
    %v2758 = vld [vmem:[#allocation10 + $0x17c] sm:$0xf]
    %v2759 = vld [vmem:[#allocation11] sm:$0x1]
    %v2761 = vlaneseq
    %v2762 = vshrl.u32 %v2761, 7
    %v2763 = vsub.s32 0, %v2762
    %v2764 = vrot.slane %v2759, %v2763
    %v2862 = vunpack.c.l.b16 %v2663
    %v2863 = vunpack.c.l.b16 %v2664
    %v2864 = vunpack.c.l.b16 %v2665
    %v2865 = vunpack.c.l.b16 %v2666
    %v2866 = vunpack.c.l.b16 %v2667
    %v2867 = vunpack.c.l.b16 %v2668
    %v2868 = vunpack.c.l.b16 %v2669
    %v2869 = vunpack.c.l.b16 %v2670
    %v2870 = vunpack.c.l.b16 %v2671
    %v2871 = vunpack.c.l.b16 %v2672
    %v2872 = vunpack.c.l.b16 %v2673
    %v2873 = vunpack.c.l.b16 %v2674
    %v2874 = vunpack.c.l.b16 %v2675
    %v2875 = vunpack.c.l.b16 %v2676
    %v2876 = vunpack.c.l.b16 %v2677
    %v2877 = vunpack.c.l.b16 %v2678
    %v2878 = vunpack.c.l.b16 %v2679
    %v2879 = vunpack.c.l.b16 %v2680
    %v2880 = vunpack.c.l.b16 %v2681
    %v2881 = vunpack.c.l.b16 %v2682
    %v2882 = vunpack.c.l.b16 %v2683
    %v2883 = vunpack.c.l.b16 %v2684
    %v2884 = vunpack.c.l.b16 %v2685
    %v2885 = vunpack.c.l.b16 %v2686
    %v2886 = vunpack.c.l.b16 %v2687
    %v2887 = vunpack.c.l.b16 %v2688
    %v2888 = vunpack.c.l.b16 %v2689
    %v2889 = vunpack.c.l.b16 %v2690
    %v2890 = vunpack.c.l.b16 %v2691
    %v2891 = vunpack.c.l.b16 %v2692
    %v2892 = vunpack.c.l.b16 %v2693
    %v2893 = vunpack.c.l.b16 %v2694
    %v2894 = vunpack.c.l.b16 %v2695
    %v2895 = vunpack.c.l.b16 %v2696
    %v2896 = vunpack.c.l.b16 %v2697
    %v2897 = vunpack.c.l.b16 %v2698
    %v2898 = vunpack.c.l.b16 %v2699
    %v2899 = vunpack.c.l.b16 %v2700
    %v2900 = vunpack.c.l.b16 %v2701
    %v2901 = vunpack.c.l.b16 %v2702
    %v2902 = vunpack.c.l.b16 %v2703
    %v2903 = vunpack.c.l.b16 %v2704
    %v2904 = vunpack.c.l.b16 %v2705
    %v2905 = vunpack.c.l.b16 %v2706
    %v2906 = vunpack.c.l.b16 %v2707
    %v2907 = vunpack.c.l.b16 %v2708
    %v2908 = vunpack.c.l.b16 %v2709
    %v2909 = vunpack.c.l.b16 %v2710
    %v2910 = vunpack.c.l.b16 %v2711
    %v2911 = vunpack.c.l.b16 %v2712
    %v2912 = vunpack.c.l.b16 %v2713
    %v2913 = vunpack.c.l.b16 %v2714
    %v2914 = vunpack.c.l.b16 %v2715
    %v2915 = vunpack.c.l.b16 %v2716
    %v2916 = vunpack.c.l.b16 %v2717
    %v2917 = vunpack.c.l.b16 %v2718
    %v2918 = vunpack.c.l.b16 %v2719
    %v2919 = vunpack.c.l.b16 %v2720
    %v2920 = vunpack.c.l.b16 %v2721
    %v2921 = vunpack.c.l.b16 %v2722
    %v2922 = vunpack.c.l.b16 %v2723
    %v2923 = vunpack.c.l.b16 %v2724
    %v2924 = vunpack.c.l.b16 %v2725
    %v2925 = vunpack.c.l.b16 %v2726
    %v2926 = vunpack.c.l.b16 %v2727
    %v2927 = vunpack.c.l.b16 %v2728
    %v2928 = vunpack.c.l.b16 %v2729
    %v2929 = vunpack.c.l.b16 %v2730
    %v2930 = vunpack.c.l.b16 %v2731
    %v2931 = vunpack.c.l.b16 %v2732
    %v2932 = vunpack.c.l.b16 %v2733
    %v2933 = vunpack.c.l.b16 %v2734
    %v2934 = vunpack.c.l.b16 %v2735
    %v2935 = vunpack.c.l.b16 %v2736
    %v2936 = vunpack.c.l.b16 %v2737
    %v2937 = vunpack.c.l.b16 %v2738
    %v2938 = vunpack.c.l.b16 %v2739
    %v2939 = vunpack.c.l.b16 %v2740
    %v2940 = vunpack.c.l.b16 %v2741
    %v2941 = vunpack.c.l.b16 %v2742
    %v2942 = vunpack.c.l.b16 %v2743
    %v2943 = vunpack.c.l.b16 %v2744
    %v2944 = vunpack.c.l.b16 %v2745
    %v2945 = vunpack.c.l.b16 %v2746
    %v2946 = vunpack.c.l.b16 %v2747
    %v2947 = vunpack.c.l.b16 %v2748
    %v2948 = vunpack.c.l.b16 %v2749
    %v2949 = vunpack.c.l.b16 %v2750
    %v2950 = vunpack.c.l.b16 %v2751
    %v2951 = vunpack.c.l.b16 %v2752
    %v2952 = vunpack.c.l.b16 %v2753
    %v2953 = vunpack.c.l.b16 %v2754
    %v2954 = vunpack.c.l.b16 %v2755
    %v2955 = vunpack.c.l.b16 %v2756
    %v2956 = vunpack.c.l.b16 %v2757
    %v2957 = vunpack.c.l.b16 %v2758
    %v2958 = vpack.c.b16 %v2863, %v2862
    %v2959 = vpack.c.b16 %v2865, %v2864
    %v2960 = vpack.c.b16 %v2867, %v2866
    %v2961 = vpack.c.b16 %v2869, %v2868
    %v2962 = vpack.c.b16 %v2871, %v2870
    %v2963 = vpack.c.b16 %v2873, %v2872
    %v2964 = vpack.c.b16 %v2875, %v2874
    %v2965 = vpack.c.b16 %v2877, %v2876
    %v2966 = vpack.c.b16 %v2879, %v2878
    %v2967 = vpack.c.b16 %v2881, %v2880
    %v2968 = vpack.c.b16 %v2883, %v2882
    %v2969 = vpack.c.b16 %v2885, %v2884
    %v2970 = vpack.c.b16 %v2887, %v2886
    %v2971 = vpack.c.b16 %v2889, %v2888
    %v2972 = vpack.c.b16 %v2891, %v2890
    %v2973 = vpack.c.b16 %v2893, %v2892
    %v2974 = vpack.c.b16 %v2895, %v2894
    %v2975 = vpack.c.b16 %v2897, %v2896
    %v2976 = vpack.c.b16 %v2899, %v2898
    %v2977 = vpack.c.b16 %v2901, %v2900
    %v2978 = vpack.c.b16 %v2903, %v2902
    %v2979 = vpack.c.b16 %v2905, %v2904
    %v2980 = vpack.c.b16 %v2907, %v2906
    %v2981 = vpack.c.b16 %v2909, %v2908
    %v2982 = vpack.c.b16 %v2911, %v2910
    %v2983 = vpack.c.b16 %v2913, %v2912
    %v2984 = vpack.c.b16 %v2915, %v2914
    %v2985 = vpack.c.b16 %v2917, %v2916
    %v2986 = vpack.c.b16 %v2919, %v2918
    %v2987 = vpack.c.b16 %v2921, %v2920
    %v2988 = vpack.c.b16 %v2923, %v2922
    %v2989 = vpack.c.b16 %v2925, %v2924
    %v2990 = vpack.c.b16 %v2927, %v2926
    %v2991 = vpack.c.b16 %v2929, %v2928
    %v2992 = vpack.c.b16 %v2931, %v2930
    %v2993 = vpack.c.b16 %v2933, %v2932
    %v2994 = vpack.c.b16 %v2935, %v2934
    %v2995 = vpack.c.b16 %v2937, %v2936
    %v2996 = vpack.c.b16 %v2939, %v2938
    %v2997 = vpack.c.b16 %v2941, %v2940
    %v2998 = vpack.c.b16 %v2943, %v2942
    %v2999 = vpack.c.b16 %v2945, %v2944
    %v3000 = vpack.c.b16 %v2947, %v2946
    %v3001 = vpack.c.b16 %v2949, %v2948
    %v3002 = vpack.c.b16 %v2951, %v2950
    %v3003 = vpack.c.b16 %v2953, %v2952
    %v3004 = vpack.c.b16 %v2955, %v2954
    %v3005 = vpack.c.b16 %v2957, %v2956
    %3054 = vmatprep.subr.bf16.mxu0 0
    %3055 = vmatpush1.bf16.msra.mxu0 %v2958
    %3056 = vmatprep.subr.bf16.mxu0 0
    %3057 = vmatpush1.bf16.msra.mxu0 %v2959
    %3058 = vmatprep.subr.bf16.mxu0 0
    %3059 = vmatpush1.bf16.msra.mxu0 %v2960
    %3060 = vmatprep.subr.bf16.mxu0 0
    %3061 = vmatpush1.bf16.msra.mxu0 %v2961
    %3062 = vmatprep.subr.bf16.mxu0 0
    %3063 = vmatpush1.bf16.msra.mxu0 %v2962
    %3064 = vmatprep.subr.bf16.mxu0 0
    %3065 = vmatpush1.bf16.msra.mxu0 %v2963
    %3066 = vmatprep.subr.bf16.mxu0 0
    %3067 = vmatpush1.bf16.msra.mxu0 %v2964
    %3068 = vmatprep.subr.bf16.mxu0 0
    %3069 = vmatpush1.bf16.msra.mxu0 %v2965
    %3070 = vmatprep.subr.bf16.mxu0 0
    %3071 = vmatpush1.bf16.msra.mxu0 %v2966
    %3072 = vmatprep.subr.bf16.mxu0 0
    %3073 = vmatpush1.bf16.msra.mxu0 %v2967
    %3074 = vmatprep.subr.bf16.mxu0 0
    %3075 = vmatpush1.bf16.msra.mxu0 %v2968
    %3076 = vmatprep.subr.bf16.mxu0 0
    %3077 = vmatpush1.bf16.msra.mxu0 %v2969
    %3078 = vmatprep.subr.bf16.mxu0 0
    %3079 = vmatpush1.bf16.msra.mxu0 %v2970
    %3080 = vmatprep.subr.bf16.mxu0 0
    %3081 = vmatpush1.bf16.msra.mxu0 %v2971
    %3082 = vmatprep.subr.bf16.mxu0 0
    %3083 = vmatpush1.bf16.msra.mxu0 %v2972
    %3084 = vmatprep.subr.bf16.mxu0 0
    %3085 = vmatpush1.bf16.msra.mxu0 %v2973
    %3086 = vmatprep.mubr.bf16.mxu0 %v2658
    %3087 = vmatmul.mubr.bf16.gmra.mrb[0].mxu0 %v2657
    %v3088 = vpop.f32.mrb[0].mxu0
    %v3089 = vadd.f32 %v2764, %v3088
    %v3090 = vpop.f32.mrb[0].mxu0
    %v3091 = vpop.f32.mrb[0].mxu0
    %v3092 = vpop.f32.mrb[0].mxu0
    %3093 = vdwg.mxu0
    %3094 = vmatprep.subr.bf16.mxu0 0
    %3095 = vmatpush1.bf16.msra.mxu0 %v2974
    %3096 = vmatprep.subr.bf16.mxu0 0
    %3097 = vmatpush1.bf16.msra.mxu0 %v2975
    %3098 = vmatprep.subr.bf16.mxu0 0
    %3099 = vmatpush1.bf16.msra.mxu0 %v2976
    %3100 = vmatprep.subr.bf16.mxu0 0
    %3101 = vmatpush1.bf16.msra.mxu0 %v2977
    %3102 = vmatprep.subr.bf16.mxu0 0
    %3103 = vmatpush1.bf16.msra.mxu0 %v2978
    %3104 = vmatprep.subr.bf16.mxu0 0
    %3105 = vmatpush1.bf16.msra.mxu0 %v2979
    %3106 = vmatprep.subr.bf16.mxu0 0
    %3107 = vmatpush1.bf16.msra.mxu0 %v2980
    %3108 = vmatprep.subr.bf16.mxu0 0
    %3109 = vmatpush1.bf16.msra.mxu0 %v2981
    %3110 = vmatprep.subr.bf16.mxu0 0
    %3111 = vmatpush1.bf16.msra.mxu0 %v2982
    %3112 = vmatprep.subr.bf16.mxu0 0
    %3113 = vmatpush1.bf16.msra.mxu0 %v2983
    %3114 = vmatprep.subr.bf16.mxu0 0
    %3115 = vmatpush1.bf16.msra.mxu0 %v2984
    %3116 = vmatprep.subr.bf16.mxu0 0
    %3117 = vmatpush1.bf16.msra.mxu0 %v2985
    %3118 = vmatprep.subr.bf16.mxu0 0
    %3119 = vmatpush1.bf16.msra.mxu0 %v2986
    %3120 = vmatprep.subr.bf16.mxu0 0
    %3121 = vmatpush1.bf16.msra.mxu0 %v2987
    %3122 = vmatprep.subr.bf16.mxu0 0
    %3123 = vmatpush1.bf16.msra.mxu0 %v2988
    %3124 = vmatprep.subr.bf16.mxu0 0
    %3125 = vmatpush1.bf16.msra.mxu0 %v2989
    %3126 = vmatprep.mubr.bf16.mxu0 %v2660
    %3127 = vmatmul.mubr.bf16.gmra.mrb[0].mxu0 %v2659
    %v3128 = vpop.f32.mrb[0].mxu0
    %v3129 = vadd.f32 %v3089, %v3128
    %v3130 = vpop.f32.mrb[0].mxu0
    %v3131 = vpop.f32.mrb[0].mxu0
    %v3132 = vpop.f32.mrb[0].mxu0
    %3133 = vdwg.mxu0
    %3134 = vmatprep.subr.bf16.mxu0 0
    %3135 = vmatpush1.bf16.msra.mxu0 %v2990
    %3136 = vmatprep.subr.bf16.mxu0 0
    %3137 = vmatpush1.bf16.msra.mxu0 %v2991
    %3138 = vmatprep.subr.bf16.mxu0 0
    %3139 = vmatpush1.bf16.msra.mxu0 %v2992
    %3140 = vmatprep.subr.bf16.mxu0 0
    %3141 = vmatpush1.bf16.msra.mxu0 %v2993
    %3142 = vmatprep.subr.bf16.mxu0 0
    %3143 = vmatpush1.bf16.msra.mxu0 %v2994
    %3144 = vmatprep.subr.bf16.mxu0 0
    %3145 = vmatpush1.bf16.msra.mxu0 %v2995
    %3146 = vmatprep.subr.bf16.mxu0 0
    %3147 = vmatpush1.bf16.msra.mxu0 %v2996
    %3148 = vmatprep.subr.bf16.mxu0 0
    %3149 = vmatpush1.bf16.msra.mxu0 %v2997
    %3150 = vmatprep.subr.bf16.mxu0 0
    %3151 = vmatpush1.bf16.msra.mxu0 %v2998
    %3152 = vmatprep.subr.bf16.mxu0 0
    %3153 = vmatpush1.bf16.msra.mxu0 %v2999
    %3154 = vmatprep.subr.bf16.mxu0 0
    %3155 = vmatpush1.bf16.msra.mxu0 %v3000
    %3156 = vmatprep.subr.bf16.mxu0 0
    %3157 = vmatpush1.bf16.msra.mxu0 %v3001
    %3158 = vmatprep.subr.bf16.mxu0 0
    %3159 = vmatpush1.bf16.msra.mxu0 %v3002
    %3160 = vmatprep.subr.bf16.mxu0 0
    %3161 = vmatpush1.bf16.msra.mxu0 %v3003
    %3162 = vmatprep.subr.bf16.mxu0 0
    %3163 = vmatpush1.bf16.msra.mxu0 %v3004
    %3164 = vmatprep.subr.bf16.mxu0 0
    %3165 = vmatpush1.bf16.msra.mxu0 %v3005
    %3166 = vmatprep.mubr.bf16.mxu0 %v2662
    %3167 = vmatmul.mubr.bf16.gmra.mrb[0].mxu0 %v2661
    %v3168 = vpop.f32.mrb[0].mxu0
    %v3169 = vadd.f32 %v3129, %v3168
    %v3170 = vpop.f32.mrb[0].mxu0
    %v3171 = vpop.f32.mrb[0].mxu0
    %v3172 = vpop.f32.mrb[0].mxu0
    %3173 = vdwg.mxu0
    %3174 = vst [vmem:[#allocation14] sm:$0xff] %v3169
    // Predicated region
    $region50: #{_fused_call.1} parent=1 // pred_check
      _
    $region51: #{_fused_call.1} parent=1 // pred_check_branch
      %3176 = sbr.rel (0) target = $region53
    $region52: #{_fused_call.1} parent=1 // pred_region
      %s3178 = ssub.s32 768, 768
      %3179 = vsyncadd [#allocation4], %s3178
      %s3181 = sshll.u32 [#allocation13], 4
      %s3182 = int_to_ptr.vmem [resolvable:$true] %s3181
      %3184 = dma.vmem_to_hbm [thread:$0]  %s3182, 768, %s6, [#allocation4]
    $region53: #{_fused_call.1} parent=1 // pred_fallthru
      _
    // Predicated region
    $region54: #{_fused_call.1} parent=1 // pred_check
      _
    $region55: #{_fused_call.1} parent=1 // pred_check_branch
      %3186 = sbr.rel (0) target = $region57
    $region56: #{_fused_call.1} parent=1 // pred_region
      %s3188 = ssub.s32 128, 128
      %3189 = vsyncadd [#allocation15], %s3188
      %s3191 = sshll.u32 [#allocation14], 4
      %s3192 = int_to_ptr.vmem [resolvable:$true] %s3191
      %3194 = dma.vmem_to_hbm [thread:$0]  %s3192, 128, %s7, [#allocation15]
    $region57: #{_fused_call.1} parent=1 // pred_fallthru
      _
    // Predicated region
    $region58: #{_fused_call.1} parent=1 // pred_check
      _
    $region59: #{_fused_call.1} parent=1 // pred_check_branch
      %3196 = sbr.rel (0) target = $region61
    $region60: #{_fused_call.1} parent=1 // pred_region
      %3197 = dma.done [#allocation4], 768
    $region61: #{_fused_call.1} parent=1 // pred_fallthru
      _
    // Predicated region
    $region62: #{_fused_call.1} parent=1 // pred_check
      _
    $region63: #{_fused_call.1} parent=1 // pred_check_branch
      %3199 = sbr.rel (0) target = $region65
    $region64: #{_fused_call.1} parent=1 // pred_region
      %3200 = dma.done [#allocation15], 128
    $region65: #{_fused_call.1} parent=1 // pred_fallthru
      _
    %3201 = vsyncpa [#allocation3], 1
    %3202 = vsyncpa [#allocation6], 1
    %3203 = vsyncpa [#allocation9], 1
    %3204 = vsyncpa [#allocation12], 1
    %3205 = vsyncpa [#allocation4], 1
    %3206 = vsyncpa [#allocation15], 1

</llo_original>
